<compile_context>
chip_gen: v7x
topology: tpu7x:2x2x1
jax: 0.10.0
libtpu: 0.0.40
codegen_flags: <defaults>
</compile_context>

<pallas_src>
import jax
import jax.numpy as jnp
from jax.experimental import pallas as pl
from jax.experimental.pallas import tpu as pltpu

LANE = 128


def _round_up(v, m):
    return ((v + m - 1) // m) * m


def _gelu_tanh(x):
    # matches WACConv.gelu exactly
    return 0.5 * x * (1.0 + jnp.tanh(0.7978845608 * (x + 0.044715 * x * x * x)))


# ---------------- Pass 1: per-edge messages (tiled over E) ----------------

def _edge_msg_kernel(xj_ref, rel_ref, entw_ref, relw_ref, norm_ref, w_ref, msg_ref):
    xj = xj_ref[...]
    # factored: xj*rel*entw + xj*relw == xj * (rel*entw + relw)  (saves one vmul)
    xj_rel = xj * (rel_ref[...] * entw_ref[...] + relw_ref[...])
    msg = jnp.dot(xj_rel.astype(jnp.bfloat16), w_ref[...],
                  preferred_element_type=jnp.float32)
    msg_ref[...] = (msg * norm_ref[...]).astype(msg_ref.dtype)


# ---- Pass 2: scatter-add + gelu update + selfloop + attention combine + BN ----

def _agg_combine_kernel(idx_ref, msg_ref, x_ref, ew2_ref, loop_rel_ref,
                        w_loop_ref, attn_ref, gamma_ref, beta_ref,
                        o_ref, acc_ref):
    n = pl.program_id(0)
    e = pl.program_id(1)

    @pl.when(e == 0)
    def _():
        acc_ref[...] = jnp.zeros_like(acc_ref)

    tn = acc_ref.shape[0]
    te = msg_ref.shape[0]
    # tile-local one-hot scatter matrix (tn, te); bf16 0/1 is exact on the MXU
    row_ids = jax.lax.broadcasted_iota(jnp.int32, (tn, te), 0) + n * tn
    scat = (row_ids == idx_ref[...]).astype(jnp.bfloat16)
    acc_ref[...] += jnp.dot(scat, msg_ref[...], preferred_element_type=jnp.float32)

    @pl.when(e == pl.num_programs(1) - 1)
    def _():
        # update() == gelu on the aggregated edge messages
        orig = _gelu_tanh(acc_ref[...])
        # attn_fc: Linear(out->1, bias=False) as VPU mul + lane reduction
        a = jnp.sum(orig * attn_ref[...], axis=-1, keepdims=True)
        out2 = a * orig
        # self-loop branch (loop_index scatter is the identity)
        h = x_ref[...] * ew2_ref[...] * loop_rel_ref[...]
        selfloop = _gelu_tanh(jnp.dot(h.astype(jnp.bfloat16), w_loop_ref[...],
                                      preferred_element_type=jnp.float32))
        combined = 0.75 * selfloop + 0.25 * out2
        # BatchNorm1d eval mode: running_mean=0, running_var=1
        inv_std = (1.0 + 1e-5) ** -0.5
        o_ref[...] = combined * inv_std * gamma_ref[...] + beta_ref[...]


# ---------------- relation transform (tiny, single block) ----------------

def _rel_kernel(rel_ref, w_ref, o_ref):
    o_ref[...] = jnp.dot(rel_ref[...].astype(jnp.bfloat16), w_ref[...],
                         preferred_element_type=jnp.float32)


# ---------------- wrapper (glue) ----------------

def wacconv_forward(x, rel_embed, params, edge_index, edge_type,
                    *, tile_n=256, tile_e=512):
    num_ent, in_ch = x.shape
    out_ch = params["w1_out"].shape[1]
    num_edges = edge_index.shape[1] // 2

    in_index = edge_index[:, :num_edges]
    out_index = edge_index[:, num_edges:]
    out_type = edge_type[num_edges:]

    rel_cat = jnp.concatenate([rel_embed, params["loop_rel"]], axis=0)

    # compute_norm(out_index, num_ent)  (constructor-time setup, plain JAX)
    row, col = out_index[0], out_index[1]
    deg = jnp.zeros((num_ent,), jnp.float32).at[row].add(1.0)
    deg_inv = jnp.where(deg > 0, deg ** -0.5, 0.0)
    out_norm = (deg_inv[row] * deg_inv[col]).reshape(num_edges, 1)

    # ---- padded sizes: lane-dense outputs, (8,128)-aligned tiles ----
    out_pad = _round_up(out_ch, LANE)
    tn = min(tile_n, _round_up(num_ent, LANE))
    te = min(tile_e, _round_up(num_edges, LANE))
    n_pad = _round_up(num_ent, tn)
    e_pad = _round_up(num_edges, te)
    grid_n, grid_e = n_pad // tn, e_pad // te

    f32, bf16 = jnp.float32, jnp.bfloat16

    def pad2(a, r, c, dtype=f32):
        return jnp.pad(a, ((0, r - a.shape[0]), (0, c - a.shape[1]))).astype(dtype)

    # node-side operands
    x_p = pad2(x, n_pad, in_ch)
    ew2_p = pad2(params["ent_weight2"], n_pad, in_ch)
    loop_rel = params["loop_rel"].astype(f32)                       # (1, in_ch)
    w_loop_p = pad2(params["w1_loop"], in_ch, out_pad, bf16)
    w_out_p = pad2(params["w1_out"], in_ch, out_pad, bf16)
    attn_p = pad2(params["attn_w"], 1, out_pad)                     # zero-padded lanes
    gamma_p = pad2(params["bn_gamma"], 1, out_pad)
    beta_p = pad2(params["bn_beta"], 1, out_pad)

    # edge-side gathered operands (glue gathers in XLA; hot loops in Pallas)
    # TODO(synk): gather x_j / rel / weights in-kernel with scalar-prefetched
    # indices to avoid materializing (E, in_ch) copies in HBM.
    x_j = pad2(x[out_index[1]], e_pad, in_ch)
    rel_e = pad2(rel_cat[out_type], e_pad, in_ch)
    ent_w_e = pad2(params["ent_weight1"][in_index[0]], e_pad, in_ch)  # torch indexes with in_index[0]
    rel_w_e = pad2(params["rel_weight1"][out_type], e_pad, in_ch)
    norm_p = pad2(out_norm, e_pad, 1)                # zero norm on pad edges -> msg 0
    idx_p = jnp.full((1, e_pad), -1, jnp.int32).at[0, :num_edges].set(
        out_index[0].astype(jnp.int32))

    # ---- pass 1: per-edge messages, tiled over E ----
    msg = pl.pallas_call(
        _edge_msg_kernel,
        grid=(grid_e,),
        in_specs=[
            pl.BlockSpec((te, in_ch), lambda e: (e, 0)),
            pl.BlockSpec((te, in_ch), lambda e: (e, 0)),
            pl.BlockSpec((te, in_ch), lambda e: (e, 0)),
            pl.BlockSpec((te, in_ch), lambda e: (e, 0)),
            pl.BlockSpec((te, 1), lambda e: (e, 0)),
            pl.BlockSpec((in_ch, out_pad), lambda e: (0, 0)),
        ],
        out_specs=pl.BlockSpec((te, out_pad), lambda e: (e, 0)),
        out_shape=jax.ShapeDtypeStruct((e_pad, out_pad), bf16),
        compiler_params=pltpu.CompilerParams(dimension_semantics=("parallel",)),
        cost_estimate=pl.CostEstimate(
            flops=2 * e_pad * in_ch * out_pad + 4 * e_pad * in_ch,
            transcendentals=0,
            bytes_accessed=4 * e_pad * in_ch * 4 + e_pad * out_pad * 2
                           + in_ch * out_pad * 2),
    )(x_j, rel_e, ent_w_e, rel_w_e, norm_p, w_out_p)

    # ---- pass 2: scatter-add over destinations + selfloop + combine + BN ----
    entity_pad = pl.pallas_call(
        _agg_combine_kernel,
        grid=(grid_n, grid_e),
        in_specs=[
            pl.BlockSpec((1, te), lambda n, e: (0, e)),            # dst indices
            pl.BlockSpec((te, out_pad), lambda n, e: (e, 0)),      # edge messages
            pl.BlockSpec((tn, in_ch), lambda n, e: (n, 0)),        # x
            pl.BlockSpec((tn, in_ch), lambda n, e: (n, 0)),        # ent_weight2
            pl.BlockSpec((1, in_ch), lambda n, e: (0, 0)),         # loop_rel
            pl.BlockSpec((in_ch, out_pad), lambda n, e: (0, 0)),   # w1_loop
            pl.BlockSpec((1, out_pad), lambda n, e: (0, 0)),       # attn weight
            pl.BlockSpec((1, out_pad), lambda n, e: (0, 0)),       # bn gamma
            pl.BlockSpec((1, out_pad), lambda n, e: (0, 0)),       # bn beta
        ],
        out_specs=pl.BlockSpec((tn, out_pad), lambda n, e: (n, 0)),
        out_shape=jax.ShapeDtypeStruct((n_pad, out_pad), f32),
        scratch_shapes=[pltpu.VMEM((tn, out_pad), f32)],
        compiler_params=pltpu.CompilerParams(
            dimension_semantics=("parallel", "arbitrary")),
        cost_estimate=pl.CostEstimate(
            flops=2 * n_pad * e_pad * out_pad + 2 * n_pad * in_ch * out_pad,
            transcendentals=2 * n_pad * out_pad,
            bytes_accessed=grid_n * (e_pad * out_pad * 2 + e_pad * 4)
                           + n_pad * (2 * in_ch + out_pad) * 4),
    )(idx_p, msg, x_p, ew2_p, loop_rel, w_loop_p, attn_p, gamma_p, beta_p)

    entity1 = entity_pad[:num_ent, :out_ch]

    # ---- relation transform: (2R+1, d) @ (d, d), tiny single-block kernel ----
    r_rows = rel_cat.shape[0]
    r_pad = _round_up(r_rows, 8)
    k_dim = params["w_rel"].shape[0]
    rel_cat_p = pad2(rel_cat, r_pad, k_dim)
    w_rel_p = pad2(params["w_rel"], k_dim, out_pad, bf16)
    rel_out = pl.pallas_call(
        _rel_kernel,
        grid=(1,),
        in_specs=[pl.BlockSpec((r_pad, k_dim), lambda i: (0, 0)),
                  pl.BlockSpec((k_dim, out_pad), lambda i: (0, 0))],
        out_specs=pl.BlockSpec((r_pad, out_pad), lambda i: (0, 0)),
        out_shape=jax.ShapeDtypeStruct((r_pad, out_pad), f32),
        compiler_params=pltpu.CompilerParams(dimension_semantics=("arbitrary",)),
    )(rel_cat_p, w_rel_p)

    relation1 = rel_out[:r_rows - 1, :out_ch]        # == relation1[:-1]

    return entity1, relation1


# ---------------- pure-JAX reference (for correctness check) ----------------

def _reference(x, rel_embed, params, edge_index, edge_type):
    num_ent, _ = x.shape
    out_ch = params["w1_out"].shape[1]
    num_edges = edge_index.shape[1] // 2
    in_index = edge_index[:, :num_edges]
    out_index = edge_index[:, num_edges:]
    out_type = edge_type[num_edges:]
    rel_cat = jnp.concatenate([rel_embed, params["loop_rel"]], axis=0)

    # self-loop branch
    h = x * params["ent_weight2"] * params["loop_rel"]
    selfloop = _gelu_tanh(h @ params["w1_loop"])

    # out-edge branch
    row, col = out_index[0], out_index[1]
    deg = jnp.zeros((num_ent,), jnp.float32).at[row].add(1.0)
    deg_inv = jnp.where(deg > 0, deg ** -0.5, 0.0)
    norm = (deg_inv[row] * deg_inv[col]).reshape(-1, 1)
    x_j = x[col]
    xj_rel = (x_j * rel_cat[out_type] * params["ent_weight1"][in_index[0]]
              + x_j * params["rel_weight1"][out_type])
    msg = (xj_rel @ params["w1_out"]) * norm
    agg = jnp.zeros((num_ent, out_ch), jnp.float32).at[row].add(msg)
    orig = _gelu_tanh(agg)

    a = orig @ params["attn_w"].T
    out2 = a * orig
    combined = 0.75 * selfloop + 0.25 * out2
    entity = combined * (1.0 + 1e-5) ** -0.5 * params["bn_gamma"] + params["bn_beta"]
    relation = (rel_cat @ params["w_rel"])[:-1]
    return entity, relation


if __name__ == "__main__":
    key = jax.random.PRNGKey(0)
    num_ent, in_ch, out_ch, num_rels, e_half = 16, 32, 32, 4, 24

    ks = jax.random.split(key, 12)

    def xavier(k, shape):
        scale = jnp.sqrt(2.0 / (shape[0] + shape[-1]))
        return jax.random.normal(k, shape, jnp.float32) * scale

    params = {
        "w1_loop": xavier(ks[0], (in_ch, out_ch)),
        "w1_out": xavier(ks[1], (in_ch, out_ch)),
        "w_rel": xavier(ks[2], (out_ch, out_ch)),
        "loop_rel": xavier(ks[3], (1, in_ch)),
        "rel_weight1": xavier(ks[4], (2 * num_rels + 1, in_ch)),
        "ent_weight1": xavier(ks[5], (num_ent, in_ch)),
        "ent_weight2": xavier(ks[6], (num_ent, in_ch)),
        "attn_w": xavier(ks[7], (1, out_ch)),          # nn.Linear(out, 1, bias=False).weight
        "bn_gamma": jnp.ones((1, out_ch), jnp.float32),
        "bn_beta": jnp.zeros((1, out_ch), jnp.float32),
    }

    x = jax.random.normal(ks[8], (num_ent, in_ch), jnp.float32)
    rel_embed = jax.random.normal(ks[9], (2 * num_rels, in_ch), jnp.float32)

    # deterministic synthetic graph: forward + inverse edges
    src = jax.random.randint(ks[10], (e_half,), 0, num_ent, jnp.int32)
    dst = jax.random.randint(ks[11], (e_half,), 0, num_ent, jnp.int32)
    in_index = jnp.stack([src, dst])
    out_index = jnp.stack([dst, src])
    edge_index = jnp.concatenate([in_index, out_index], axis=1)          # (2, 2*e_half)
    in_type = jax.random.randint(jax.random.PRNGKey(123), (e_half,), 0, num_rels, jnp.int32)
    edge_type = jnp.concatenate([in_type, in_type + num_rels])           # (2*e_half,)

    fwd = jax.jit(wacconv_forward)
    entity1, relation1 = fwd(x, rel_embed, params, edge_index, edge_type)
    jax.block_until_ready((entity1, relation1))

    assert entity1.shape == (num_ent, out_ch)
    assert relation1.shape == (2 * num_rels, out_ch)

    ent_ref, rel_ref = _reference(x, rel_embed, params, edge_index, edge_type)
    assert bool(jnp.allclose(entity1, ent_ref, atol=5e-2, rtol=5e-2)), "entity mismatch"
    assert bool(jnp.allclose(relation1, rel_ref, atol=5e-2, rtol=5e-2)), "relation mismatch"

    print("KERNEL_OK")
</pallas_src>

<mosaic_0001>
module attributes {stable_mosaic.version = 11 : i64} {
  func.func @_rel_kernel(%arg0: i32, %arg1: memref<16x32xf32, #tpu.memory_space<vmem>>, %arg2: memref<32x128xbf16, #tpu.memory_space<vmem>>, %arg3: memref<16x128xf32, #tpu.memory_space<vmem>>) attributes {dimension_semantics = [#tpu.dimension_semantics<arbitrary>], iteration_bounds = array<i64: 1>, scalar_prefetch = 0 : i64, scratch_operands = 0 : i64, tpu.core_type = #tpu.core_type<tc>, window_params = [{pipeline_mode = #tpu.pipeline_mode<synchronous>, transform_indices = @transform_0, window_bounds = array<i64: 16, 32>}, {pipeline_mode = #tpu.pipeline_mode<synchronous>, transform_indices = @transform_1, window_bounds = array<i64: 32, 128>}, {pipeline_mode = #tpu.pipeline_mode<synchronous>, transform_indices = @transform_2, window_bounds = array<i64: 16, 128>}]} {
    %c0 = arith.constant 0 : index
    %c0_0 = arith.constant 0 : index
    %0 = vector.load %arg1[%c0, %c0_0] : memref<16x32xf32, #tpu.memory_space<vmem>>, vector<16x32xf32>
    %1 = arith.truncf %0 : vector<16x32xf32> to vector<16x32xbf16>
    %c0_1 = arith.constant 0 : index
    %c0_2 = arith.constant 0 : index
    %2 = vector.load %arg2[%c0_1, %c0_2] : memref<32x128xbf16, #tpu.memory_space<vmem>>, vector<32x128xbf16>
    %cst = arith.constant dense<0.000000e+00> : vector<16x128xf32>
    %3 = tpu.matmul %1, %2, %cst {dimension_numbers = #tpu.dot_dimension_numbers<[1], [0], [0], [1], [0, 0, 1, 1], [], []>} : vector<16x32xbf16>, vector<32x128xbf16>, vector<16x128xf32> -> vector<16x128xf32>
    %c0_3 = arith.constant 0 : index
    %c0_4 = arith.constant 0 : index
    %4 = vector.load %arg3[%c0_3, %c0_4] : memref<16x128xf32, #tpu.memory_space<vmem>>, vector<16x128xf32>
    tpu.vector_store %arg3[%c0_3, %c0_4], %3 {strides = array<i32>} : memref<16x128xf32, #tpu.memory_space<vmem>>, vector<16x128xf32>,
    return
  }
  func.func @transform_0(%arg0: i32) -> (i32, i32) {
    %c0_i32 = arith.constant 0 : i32
    %c0_i32_0 = arith.constant 0 : i32
    %c0_i32_1 = arith.constant 0 : i32
    return %c0_i32, %c0_i32_0 : i32, i32
  }
  func.func @transform_1(%arg0: i32) -> (i32, i32) {
    %c0_i32 = arith.constant 0 : i32
    %c0_i32_0 = arith.constant 0 : i32
    %c0_i32_1 = arith.constant 0 : i32
    return %c0_i32, %c0_i32_0 : i32, i32
  }
  func.func @transform_2(%arg0: i32) -> (i32, i32) {
    %c0_i32 = arith.constant 0 : i32
    %c0_i32_0 = arith.constant 0 : i32
    %c0_i32_1 = arith.constant 0 : i32
    return %c0_i32, %c0_i32_0 : i32, i32
  }
}

module attributes {stable_mosaic.version = 11 : i64} {
  func.func @_agg_combine_kernel(%arg0: i32, %arg1: i32, %arg2: memref<1x128xi32, #tpu.memory_space<vmem>>, %arg3: memref<128x128xbf16, #tpu.memory_space<vmem>>, %arg4: memref<128x32xf32, #tpu.memory_space<vmem>>, %arg5: memref<128x32xf32, #tpu.memory_space<vmem>>, %arg6: memref<1x32xf32, #tpu.memory_space<vmem>>, %arg7: memref<32x128xbf16, #tpu.memory_space<vmem>>, %arg8: memref<1x128xf32, #tpu.memory_space<vmem>>, %arg9: memref<1x128xf32, #tpu.memory_space<vmem>>, %arg10: memref<1x128xf32, #tpu.memory_space<vmem>>, %arg11: memref<128x128xf32, #tpu.memory_space<vmem>>, %arg12: memref<128x128xf32, #tpu.memory_space<vmem>>) attributes {dimension_semantics = [#tpu.dimension_semantics<parallel>, #tpu.dimension_semantics<arbitrary>], iteration_bounds = array<i64: 1, 1>, scalar_prefetch = 0 : i64, scratch_operands = 1 : i64, tpu.core_type = #tpu.core_type<tc>, window_params = [{transform_indices = @transform_0, window_bounds = array<i64: 1, 128>}, {transform_indices = @transform_1, window_bounds = array<i64: 128, 128>}, {transform_indices = @transform_2, window_bounds = array<i64: 128, 32>}, {transform_indices = @transform_3, window_bounds = array<i64: 128, 32>}, {pipeline_mode = #tpu.pipeline_mode<synchronous>, transform_indices = @transform_4, window_bounds = array<i64: 1, 32>}, {pipeline_mode = #tpu.pipeline_mode<synchronous>, transform_indices = @transform_5, window_bounds = array<i64: 32, 128>}, {pipeline_mode = #tpu.pipeline_mode<synchronous>, transform_indices = @transform_6, window_bounds = array<i64: 1, 128>}, {pipeline_mode = #tpu.pipeline_mode<synchronous>, transform_indices = @transform_7, window_bounds = array<i64: 1, 128>}, {pipeline_mode = #tpu.pipeline_mode<synchronous>, transform_indices = @transform_8, window_bounds = array<i64: 1, 128>}, {transform_indices = @transform_9, window_bounds = array<i64: 128, 128>}]} {
    %c0_i32 = arith.constant 0 : i32
    %0 = arith.cmpi eq, %arg1, %c0_i32 : i32
    %1 = arith.extui %0 : i1 to i32
    %c0_i32_0 = arith.constant 0 : i32
    %2 = arith.cmpi ne, %1, %c0_i32_0 : i32
    scf.if %2 {
      %cst_10 = arith.constant 0.000000e+00 : f32
      %21 = vector.broadcast %cst_10 : f32 to vector<128x128xf32>
      %c0_11 = arith.constant 0 : index
      %c0_12 = arith.constant 0 : index
      %22 = vector.load %arg12[%c0_11, %c0_12] : memref<128x128xf32, #tpu.memory_space<vmem>>, vector<128x128xf32>
      tpu.vector_store %arg12[%c0_11, %c0_12], %21 {strides = array<i32>} : memref<128x128xf32, #tpu.memory_space<vmem>>, vector<128x128xf32>,
    } else {
    }
    %3 = tpu.iota {dimensions = array<i32: 0>} : vector<128x128xi32>
    %c128_i32 = arith.constant 128 : i32
    %4 = arith.muli %arg0, %c128_i32 : i32
    %5 = vector.broadcast %4 : i32 to vector<128x128xi32>
    %6 = arith.addi %3, %5 : vector<128x128xi32>
    %c0 = arith.constant 0 : index
    %c0_1 = arith.constant 0 : index
    %7 = vector.load %arg2[%c0, %c0_1] : memref<1x128xi32, #tpu.memory_space<vmem>>, vector<1x128xi32>
    %8 = vector.broadcast %7 : vector<1x128xi32> to vector<128x128xi32>
    %9 = arith.cmpi eq, %6, %8 : vector<128x128xi32>
    %10 = arith.extui %9 : vector<128x128xi1> to vector<128x128xi32>
    %11 = arith.sitofp %10 : vector<128x128xi32> to vector<128x128xf32>
    %12 = arith.truncf %11 : vector<128x128xf32> to vector<128x128xbf16>
    %c0_2 = arith.constant 0 : index
    %c0_3 = arith.constant 0 : index
    %13 = vector.load %arg12[%c0_2, %c0_3] : memref<128x128xf32, #tpu.memory_space<vmem>>, vector<128x128xf32>
    %c0_4 = arith.constant 0 : index
    %c0_5 = arith.constant 0 : index
    %14 = vector.load %arg3[%c0_4, %c0_5] : memref<128x128xbf16, #tpu.memory_space<vmem>>, vector<128x128xbf16>
    %cst = arith.constant dense<0.000000e+00> : vector<128x128xf32>
    %15 = tpu.matmul %12, %14, %cst {dimension_numbers = #tpu.dot_dimension_numbers<[1], [0], [0], [1], [0, 0, 1, 1], [], []>} : vector<128x128xbf16>, vector<128x128xbf16>, vector<128x128xf32> -> vector<128x128xf32>
    %16 = arith.addf %13, %15 : vector<128x128xf32>
    %c0_6 = arith.constant 0 : index
    %c0_7 = arith.constant 0 : index
    %17 = vector.load %arg12[%c0_6, %c0_7] : memref<128x128xf32, #tpu.memory_space<vmem>>, vector<128x128xf32>
    tpu.vector_store %arg12[%c0_6, %c0_7], %16 {strides = array<i32>} : memref<128x128xf32, #tpu.memory_space<vmem>>, vector<128x128xf32>,
    %c0_i32_8 = arith.constant 0 : i32
    %18 = arith.cmpi eq, %arg1, %c0_i32_8 : i32
    %19 = arith.extui %18 : i1 to i32
    %c0_i32_9 = arith.constant 0 : i32
    %20 = arith.cmpi ne, %19, %c0_i32_9 : i32
    scf.if %20 {
      %c0_10 = arith.constant 0 : index
      %c0_11 = arith.constant 0 : index
      %21 = vector.load %arg12[%c0_10, %c0_11] : memref<128x128xf32, #tpu.memory_space<vmem>>, vector<128x128xf32>
      %cst_12 = arith.constant 5.000000e-01 : f32
      %22 = vector.broadcast %cst_12 : f32 to vector<128x128xf32>
      %23 = arith.mulf %22, %21 : vector<128x128xf32>
      %cst_13 = arith.constant 4.471500e-02 : f32
      %24 = vector.broadcast %cst_13 : f32 to vector<128x128xf32>
      %25 = arith.mulf %24, %21 : vector<128x128xf32>
      %26 = arith.mulf %25, %21 : vector<128x128xf32>
      %27 = arith.mulf %26, %21 : vector<128x128xf32>
      %28 = arith.addf %21, %27 : vector<128x128xf32>
      %cst_14 = arith.constant 0.797884583 : f32
      %29 = vector.broadcast %cst_14 : f32 to vector<128x128xf32>
      %30 = arith.mulf %29, %28 : vector<128x128xf32>
      %31 = math.tanh %30 : vector<128x128xf32>
      %cst_15 = arith.constant 1.000000e+00 : f32
      %32 = vector.broadcast %cst_15 : f32 to vector<128x128xf32>
      %33 = arith.addf %32, %31 : vector<128x128xf32>
      %34 = arith.mulf %23, %33 : vector<128x128xf32>
      %c0_16 = arith.constant 0 : index
      %c0_17 = arith.constant 0 : index
      %35 = vector.load %arg8[%c0_16, %c0_17] : memref<1x128xf32, #tpu.memory_space<vmem>>, vector<1x128xf32>
      %36 = vector.broadcast %35 : vector<1x128xf32> to vector<128x128xf32>
      %37 = arith.mulf %34, %36 : vector<128x128xf32>
      %cst_18 = arith.constant dense<0.000000e+00> : vector<128xf32>
      %38 = vector.multi_reduction <add>, %37, %cst_18 [1] : vector<128x128xf32> to vector<128xf32>
      %39 = vector.shape_cast %38 : vector<128xf32> to vector<128x1xf32>
      %40 = vector.broadcast %39 : vector<128x1xf32> to vector<128x128xf32>
      %41 = arith.mulf %40, %34 : vector<128x128xf32>
      %c0_19 = arith.constant 0 : index
      %c0_20 = arith.constant 0 : index
      %42 = vector.load %arg4[%c0_19, %c0_20] : memref<128x32xf32, #tpu.memory_space<vmem>>, vector<128x32xf32>
      %c0_21 = arith.constant 0 : index
      %c0_22 = arith.constant 0 : index
      %43 = vector.load %arg5[%c0_21, %c0_22] : memref<128x32xf32, #tpu.memory_space<vmem>>, vector<128x32xf32>
      %44 = arith.mulf %42, %43 : vector<128x32xf32>
      %c0_23 = arith.constant 0 : index
      %c0_24 = arith.constant 0 : index
      %45 = vector.load %arg6[%c0_23, %c0_24] : memref<1x32xf32, #tpu.memory_space<vmem>>, vector<1x32xf32>
      %46 = vector.broadcast %45 : vector<1x32xf32> to vector<128x32xf32>
      %47 = arith.mulf %44, %46 : vector<128x32xf32>
      %48 = arith.truncf %47 : vector<128x32xf32> to vector<128x32xbf16>
      %c0_25 = arith.constant 0 : index
      %c0_26 = arith.constant 0 : index
      %49 = vector.load %arg7[%c0_25, %c0_26] : memref<32x128xbf16, #tpu.memory_space<vmem>>, vector<32x128xbf16>
      %cst_27 = arith.constant dense<0.000000e+00> : vector<128x128xf32>
      %50 = tpu.matmul %48, %49, %cst_27 {dimension_numbers = #tpu.dot_dimension_numbers<[1], [0], [0], [1], [0, 0, 1, 1], [], []>} : vector<128x32xbf16>, vector<32x128xbf16>, vector<128x128xf32> -> vector<128x128xf32>
      %cst_28 = arith.constant 5.000000e-01 : f32
      %51 = vector.broadcast %cst_28 : f32 to vector<128x128xf32>
      %52 = arith.mulf %51, %50 : vector<128x128xf32>
      %cst_29 = arith.constant 4.471500e-02 : f32
      %53 = vector.broadcast %cst_29 : f32 to vector<128x128xf32>
      %54 = arith.mulf %53, %50 : vector<128x128xf32>
      %55 = arith.mulf %54, %50 : vector<128x128xf32>
      %56 = arith.mulf %55, %50 : vector<128x128xf32>
      %57 = arith.addf %50, %56 : vector<128x128xf32>
      %cst_30 = arith.constant 0.797884583 : f32
      %58 = vector.broadcast %cst_30 : f32 to vector<128x128xf32>
      %59 = arith.mulf %58, %57 : vector<128x128xf32>
      %60 = math.tanh %59 : vector<128x128xf32>
      %cst_31 = arith.constant 1.000000e+00 : f32
      %61 = vector.broadcast %cst_31 : f32 to vector<128x128xf32>
      %62 = arith.addf %61, %60 : vector<128x128xf32>
      %63 = arith.mulf %52, %62 : vector<128x128xf32>
      %cst_32 = arith.constant 7.500000e-01 : f32
      %64 = vector.broadcast %cst_32 : f32 to vector<128x128xf32>
      %65 = arith.mulf %64, %63 : vector<128x128xf32>
      %cst_33 = arith.constant 2.500000e-01 : f32
      %66 = vector.broadcast %cst_33 : f32 to vector<128x128xf32>
      %67 = arith.mulf %66, %41 : vector<128x128xf32>
      %68 = arith.addf %65, %67 : vector<128x128xf32>
      %cst_34 = arith.constant 0.999994993 : f32
      %69 = vector.broadcast %cst_34 : f32 to vector<128x128xf32>
      %70 = arith.mulf %68, %69 : vector<128x128xf32>
      %c0_35 = arith.constant 0 : index
      %c0_36 = arith.constant 0 : index
      %71 = vector.load %arg9[%c0_35, %c0_36] : memref<1x128xf32, #tpu.memory_space<vmem>>, vector<1x128xf32>
      %72 = vector.broadcast %71 : vector<1x128xf32> to vector<128x128xf32>
      %73 = arith.mulf %70, %72 : vector<128x128xf32>
      %c0_37 = arith.constant 0 : index
      %c0_38 = arith.constant 0 : index
      %74 = vector.load %arg10[%c0_37, %c0_38] : memref<1x128xf32, #tpu.memory_space<vmem>>, vector<1x128xf32>
      %75 = vector.broadcast %74 : vector<1x128xf32> to vector<128x128xf32>
      %76 = arith.addf %73, %75 : vector<128x128xf32>
      %c0_39 = arith.constant 0 : index
      %c0_40 = arith.constant 0 : index
      %77 = vector.load %arg11[%c0_39, %c0_40] : memref<128x128xf32, #tpu.memory_space<vmem>>, vector<128x128xf32>
      tpu.vector_store %arg11[%c0_39, %c0_40], %76 {strides = array<i32>} : memref<128x128xf32, #tpu.memory_space<vmem>>, vector<128x128xf32>,
    } else {
    }
    return
  }
  func.func @transform_0(%arg0: i32, %arg1: i32) -> (i32, i32) {
    %c0_i32 = arith.constant 0 : i32
    %c0_i32_0 = arith.constant 0 : i32
    return %c0_i32, %arg1 : i32, i32
  }
  func.func @transform_1(%arg0: i32, %arg1: i32) -> (i32, i32) {
    %c0_i32 = arith.constant 0 : i32
    %c0_i32_0 = arith.constant 0 : i32
    return %arg1, %c0_i32 : i32, i32
  }
  func.func @transform_2(%arg0: i32, %arg1: i32) -> (i32, i32) {
    %c0_i32 = arith.constant 0 : i32
    %c0_i32_0 = arith.constant 0 : i32
    return %arg0, %c0_i32 : i32, i32
  }
  func.func @transform_3(%arg0: i32, %arg1: i32) -> (i32, i32) {
    %c0_i32 = arith.constant 0 : i32
    %c0_i32_0 = arith.constant 0 : i32
    return %arg0, %c0_i32 : i32, i32
  }
  func.func @transform_4(%arg0: i32, %arg1: i32) -> (i32, i32) {
    %c0_i32 = arith.constant 0 : i32
    %c0_i32_0 = arith.constant 0 : i32
    %c0_i32_1 = arith.constant 0 : i32
    return %c0_i32, %c0_i32_0 : i32, i32
  }
  func.func @transform_5(%arg0: i32, %arg1: i32) -> (i32, i32) {
    %c0_i32 = arith.constant 0 : i32
    %c0_i32_0 = arith.constant 0 : i32
    %c0_i32_1 = arith.constant 0 : i32
    return %c0_i32, %c0_i32_0 : i32, i32
  }
  func.func @transform_6(%arg0: i32, %arg1: i32) -> (i32, i32) {
    %c0_i32 = arith.constant 0 : i32
    %c0_i32_0 = arith.constant 0 : i32
    %c0_i32_1 = arith.constant 0 : i32
    return %c0_i32, %c0_i32_0 : i32, i32
  }
  func.func @transform_7(%arg0: i32, %arg1: i32) -> (i32, i32) {
    %c0_i32 = arith.constant 0 : i32
    %c0_i32_0 = arith.constant 0 : i32
    %c0_i32_1 = arith.constant 0 : i32
    return %c0_i32, %c0_i32_0 : i32, i32
  }
  func.func @transform_8(%arg0: i32, %arg1: i32) -> (i32, i32) {
    %c0_i32 = arith.constant 0 : i32
    %c0_i32_0 = arith.constant 0 : i32
    %c0_i32_1 = arith.constant 0 : i32
    return %c0_i32, %c0_i32_0 : i32, i32
  }
  func.func @transform_9(%arg0: i32, %arg1: i32) -> (i32, i32) {
    %c0_i32 = arith.constant 0 : i32
    %c0_i32_0 = arith.constant 0 : i32
    return %arg0, %c0_i32 : i32, i32
  }
}

module attributes {stable_mosaic.version = 11 : i64} {
  func.func @_edge_msg_kernel(%arg0: i32, %arg1: memref<128x32xf32, #tpu.memory_space<vmem>>, %arg2: memref<128x32xf32, #tpu.memory_space<vmem>>, %arg3: memref<128x32xf32, #tpu.memory_space<vmem>>, %arg4: memref<128x32xf32, #tpu.memory_space<vmem>>, %arg5: memref<128x1xf32, #tpu.memory_space<vmem>>, %arg6: memref<32x128xbf16, #tpu.memory_space<vmem>>, %arg7: memref<128x128xbf16, #tpu.memory_space<vmem>>) attributes {dimension_semantics = [#tpu.dimension_semantics<parallel>], iteration_bounds = array<i64: 1>, scalar_prefetch = 0 : i64, scratch_operands = 0 : i64, tpu.core_type = #tpu.core_type<tc>, window_params = [{transform_indices = @transform_0, window_bounds = array<i64: 128, 32>}, {transform_indices = @transform_1, window_bounds = array<i64: 128, 32>}, {transform_indices = @transform_2, window_bounds = array<i64: 128, 32>}, {transform_indices = @transform_3, window_bounds = array<i64: 128, 32>}, {transform_indices = @transform_4, window_bounds = array<i64: 128, 1>}, {pipeline_mode = #tpu.pipeline_mode<synchronous>, transform_indices = @transform_5, window_bounds = array<i64: 32, 128>}, {transform_indices = @transform_6, window_bounds = array<i64: 128, 128>}]} {
    %c0 = arith.constant 0 : index
    %c0_0 = arith.constant 0 : index
    %0 = vector.load %arg1[%c0, %c0_0] : memref<128x32xf32, #tpu.memory_space<vmem>>, vector<128x32xf32>
    %c0_1 = arith.constant 0 : index
    %c0_2 = arith.constant 0 : index
    %1 = vector.load %arg2[%c0_1, %c0_2] : memref<128x32xf32, #tpu.memory_space<vmem>>, vector<128x32xf32>
    %c0_3 = arith.constant 0 : index
    %c0_4 = arith.constant 0 : index
    %2 = vector.load %arg3[%c0_3, %c0_4] : memref<128x32xf32, #tpu.memory_space<vmem>>, vector<128x32xf32>
    %3 = arith.mulf %1, %2 : vector<128x32xf32>
    %c0_5 = arith.constant 0 : index
    %c0_6 = arith.constant 0 : index
    %4 = vector.load %arg4[%c0_5, %c0_6] : memref<128x32xf32, #tpu.memory_space<vmem>>, vector<128x32xf32>
    %5 = arith.addf %3, %4 : vector<128x32xf32>
    %6 = arith.mulf %0, %5 : vector<128x32xf32>
    %7 = arith.truncf %6 : vector<128x32xf32> to vector<128x32xbf16>
    %c0_7 = arith.constant 0 : index
    %c0_8 = arith.constant 0 : index
    %8 = vector.load %arg6[%c0_7, %c0_8] : memref<32x128xbf16, #tpu.memory_space<vmem>>, vector<32x128xbf16>
    %cst = arith.constant dense<0.000000e+00> : vector<128x128xf32>
    %9 = tpu.matmul %7, %8, %cst {dimension_numbers = #tpu.dot_dimension_numbers<[1], [0], [0], [1], [0, 0, 1, 1], [], []>} : vector<128x32xbf16>, vector<32x128xbf16>, vector<128x128xf32> -> vector<128x128xf32>
    %c0_9 = arith.constant 0 : index
    %c0_10 = arith.constant 0 : index
    %10 = vector.load %arg5[%c0_9, %c0_10] : memref<128x1xf32, #tpu.memory_space<vmem>>, vector<128x1xf32>
    %11 = vector.broadcast %10 : vector<128x1xf32> to vector<128x128xf32>
    %12 = arith.mulf %9, %11 : vector<128x128xf32>
    %13 = arith.truncf %12 : vector<128x128xf32> to vector<128x128xbf16>
    %c0_11 = arith.constant 0 : index
    %c0_12 = arith.constant 0 : index
    %14 = vector.load %arg7[%c0_11, %c0_12] : memref<128x128xbf16, #tpu.memory_space<vmem>>, vector<128x128xbf16>
    tpu.vector_store %arg7[%c0_11, %c0_12], %13 {strides = array<i32>} : memref<128x128xbf16, #tpu.memory_space<vmem>>, vector<128x128xbf16>,
    return
  }
  func.func @transform_0(%arg0: i32) -> (i32, i32) {
    %c0_i32 = arith.constant 0 : i32
    %c0_i32_0 = arith.constant 0 : i32
    return %arg0, %c0_i32 : i32, i32
  }
  func.func @transform_1(%arg0: i32) -> (i32, i32) {
    %c0_i32 = arith.constant 0 : i32
    %c0_i32_0 = arith.constant 0 : i32
    return %arg0, %c0_i32 : i32, i32
  }
  func.func @transform_2(%arg0: i32) -> (i32, i32) {
    %c0_i32 = arith.constant 0 : i32
    %c0_i32_0 = arith.constant 0 : i32
    return %arg0, %c0_i32 : i32, i32
  }
  func.func @transform_3(%arg0: i32) -> (i32, i32) {
    %c0_i32 = arith.constant 0 : i32
    %c0_i32_0 = arith.constant 0 : i32
    return %arg0, %c0_i32 : i32, i32
  }
  func.func @transform_4(%arg0: i32) -> (i32, i32) {
    %c0_i32 = arith.constant 0 : i32
    %c0_i32_0 = arith.constant 0 : i32
    return %arg0, %c0_i32 : i32, i32
  }
  func.func @transform_5(%arg0: i32) -> (i32, i32) {
    %c0_i32 = arith.constant 0 : i32
    %c0_i32_0 = arith.constant 0 : i32
    %c0_i32_1 = arith.constant 0 : i32
    return %c0_i32, %c0_i32_0 : i32, i32
  }
  func.func @transform_6(%arg0: i32) -> (i32, i32) {
    %c0_i32 = arith.constant 0 : i32
    %c0_i32_0 = arith.constant 0 : i32
    return %arg0, %c0_i32 : i32, i32
  }
}

</mosaic_0001>

<llo_original>
// kernel: wacconv_forward.5
$region0: #{wacconv_forward.5}
  #allocation0 [shape = 'u32[]', space=smem, size = 0x4, offset = 0x4, fixed_abs, tag = 'smem constant byte address 0x4 - core index']
  #allocation1 [shape = 'u32[144,128]{1,0:T(1,128)}', space=vmem, size = 0x12000, scoped, tag = 'internal scratch']
  %s0 = inlined_call_operand.vmem [shape: f32[16,32], index: 0, kind: input, shape index: {}]
  %s1 = inlined_call_operand.vmem [shape: bf16[32,128], index: 1, kind: input, shape index: {}]
  %s2 = inlined_call_operand.vmem [shape: f32[16,128], index: 2, kind: output, shape index: {}]
  %s3 = sld [smem:[#allocation0]]
  $region18: #{wacconv_forward.5} parent=0
    _
  %s5 = ssub.s32 1, %s3
  %s6 = scalar_select 0, %s5, %s3
  // Predicated region
  $region2: #{wacconv_forward.5} parent=0 // pred_check
    _
  $region3: #{wacconv_forward.5} parent=0 // pred_check_branch
    %8 = sbr.rel (0) target = $region5
  $region4: #{wacconv_forward.5} parent=0 // pred_region
    _
  $region5: #{wacconv_forward.5} parent=0 // pred_fallthru
    _
  // Predicated region
  $region6: #{wacconv_forward.5} parent=0 // pred_check
    _
  $region7: #{wacconv_forward.5} parent=0 // pred_check_branch
    %10 = sbr.rel (0) target = $region9
  $region8: #{wacconv_forward.5} parent=0 // pred_region
    _
  $region9: #{wacconv_forward.5} parent=0 // pred_fallthru
    _
  %v12 = vld [vmem:[%s0] sm:$0xff]
  %v13 = vld [vmem:[%s0 + $0x8] sm:$0xff]
  %v14 = vpack.c.bf16 %v13, %v12
  %v15 = vld [vmem:[%s1] sm:$0xf]
  %v16 = vld [vmem:[%s1 + $0x4] sm:$0xf]
  %v17 = vld [vmem:[%s1 + $0x8] sm:$0xf]
  %v18 = vld [vmem:[%s1 + $0xc] sm:$0xf]
  %v23 = vunpack.c.l.b16 %v15
  %v24 = vunpack.c.l.b16 %v16
  %v25 = vunpack.c.l.b16 %v17
  %v26 = vunpack.c.l.b16 %v18
  %v27 = vpack.c.b16 %v24, %v23
  %v28 = vpack.c.b16 %v26, %v25
  %vm31 = vcmask 261120
  %v33 = vsel %vm31, %v14, 0
  %35 = vmatprep.subr.bf16.mxu0 0
  %36 = vmatpush1.bf16.msra.mxu0 %v27
  %37 = vmatprep.subr.bf16.mxu0 0
  %38 = vmatpush1.bf16.msra.mxu0 %v28
  %39 = vmatprep.subr.bf16.mxu0 0
  %40 = vmatpush1.bf16.msra.mxu0 0
  %41 = vmatprep.subr.bf16.mxu0 0
  %42 = vmatpush1.bf16.msra.mxu0 0
  %43 = vmatprep.subr.bf16.mxu0 0
  %44 = vmatpush1.bf16.msra.mxu0 0
  %45 = vmatprep.subr.bf16.mxu0 0
  %46 = vmatpush1.bf16.msra.mxu0 0
  %47 = vmatprep.subr.bf16.mxu0 0
  %48 = vmatpush1.bf16.msra.mxu0 0
  %49 = vmatprep.subr.bf16.mxu0 0
  %50 = vmatpush1.bf16.msra.mxu0 0
  %51 = vmatprep.subr.bf16.mxu0 0
  %52 = vmatpush1.bf16.msra.mxu0 0
  %53 = vmatprep.subr.bf16.mxu0 0
  %54 = vmatpush1.bf16.msra.mxu0 0
  %55 = vmatprep.subr.bf16.mxu0 0
  %56 = vmatpush1.bf16.msra.mxu0 0
  %57 = vmatprep.subr.bf16.mxu0 0
  %58 = vmatpush1.bf16.msra.mxu0 0
  %59 = vmatprep.subr.bf16.mxu0 0
  %60 = vmatpush1.bf16.msra.mxu0 0
  %61 = vmatprep.subr.bf16.mxu0 0
  %62 = vmatpush1.bf16.msra.mxu0 0
  %63 = vmatprep.subr.bf16.mxu0 0
  %64 = vmatpush1.bf16.msra.mxu0 0
  %65 = vmatprep.subr.bf16.mxu0 0
  %66 = vmatpush1.bf16.msra.mxu0 0
  %67 = vmatprep.mubr.bf16.mxu0 0
  %68 = vmatmul.mubr.bf16.gmra.mrb[0].mxu0 %v33
  %v69 = vpop.f32.mrb[0].mxu0
  %v70 = vadd.f32 0.0, %v69
  %v71 = vpop.f32.mrb[0].mxu0
  %v72 = vpop.f32.mrb[0].mxu0
  %v73 = vadd.f32 0.0, %v72
  %v74 = vpop.f32.mrb[0].mxu0
  %75 = vdwg.mxu0
  %76 = vst [vmem:[%s2] sm:$0xff] %v70
  %77 = vst [vmem:[%s2 + $0x8] sm:$0xff] %v73
  // Predicated region
  $region10: #{wacconv_forward.5} parent=0 // pred_check
    _
  $region11: #{wacconv_forward.5} parent=0 // pred_check_branch
    %79 = sbr.rel (0) target = $region13
  $region12: #{wacconv_forward.5} parent=0 // pred_region
    _
  $region13: #{wacconv_forward.5} parent=0 // pred_fallthru
    _
  // Predicated region
  $region14: #{wacconv_forward.5} parent=0 // pred_check
    _
  $region15: #{wacconv_forward.5} parent=0 // pred_check_branch
    %81 = sbr.rel (0) target = $region17
  $region16: #{wacconv_forward.5} parent=0 // pred_region
    _
  $region17: #{wacconv_forward.5} parent=0 // pred_fallthru
    _

// kernel: wacconv_forward.3
$region0: #{wacconv_forward.3}
  #allocation0 [shape = 'u32[]', space=smem, size = 0x4, offset = 0x4, fixed_abs, tag = 'smem constant byte address 0x4 - core index']
  #allocation1 [shape = 'u32[144,128]{1,0:T(1,128)}', space=vmem, size = 0x12000, scoped, tag = 'internal scratch']
  %s0 = inlined_call_operand.vmem [shape: f32[128,32], index: 0, kind: input, shape index: {}]
  %s1 = inlined_call_operand.vmem [shape: f32[128,32], index: 1, kind: input, shape index: {}]
  %s2 = inlined_call_operand.vmem [shape: f32[128,32], index: 2, kind: input, shape index: {}]
  %s3 = inlined_call_operand.vmem [shape: f32[128,32], index: 3, kind: input, shape index: {}]
  %s4 = inlined_call_operand.vmem [shape: f32[128,1], index: 4, kind: input, shape index: {}]
  %s5 = inlined_call_operand.vmem [shape: bf16[32,128], index: 5, kind: input, shape index: {}]
  %s6 = inlined_call_operand.vmem [shape: bf16[128,128], index: 6, kind: output, shape index: {}]
  %s7 = sld [smem:[#allocation0]]
  $region34: #{wacconv_forward.3} parent=0
    _
  %s9 = ssub.s32 1, %s7
  %s10 = scalar_select 0, %s9, %s7
  // Predicated region
  $region2: #{wacconv_forward.3} parent=0 // pred_check
    _
  $region3: #{wacconv_forward.3} parent=0 // pred_check_branch
    %12 = sbr.rel (0) target = $region5
  $region4: #{wacconv_forward.3} parent=0 // pred_region
    _
  $region5: #{wacconv_forward.3} parent=0 // pred_fallthru
    _
  // Predicated region
  $region6: #{wacconv_forward.3} parent=0 // pred_check
    _
  $region7: #{wacconv_forward.3} parent=0 // pred_check_branch
    %14 = sbr.rel (0) target = $region9
  $region8: #{wacconv_forward.3} parent=0 // pred_region
    _
  $region9: #{wacconv_forward.3} parent=0 // pred_fallthru
    _
  // Predicated region
  $region10: #{wacconv_forward.3} parent=0 // pred_check
    _
  $region11: #{wacconv_forward.3} parent=0 // pred_check_branch
    %16 = sbr.rel (0) target = $region13
  $region12: #{wacconv_forward.3} parent=0 // pred_region
    _
  $region13: #{wacconv_forward.3} parent=0 // pred_fallthru
    _
  // Predicated region
  $region14: #{wacconv_forward.3} parent=0 // pred_check
    _
  $region15: #{wacconv_forward.3} parent=0 // pred_check_branch
    %18 = sbr.rel (0) target = $region17
  $region16: #{wacconv_forward.3} parent=0 // pred_region
    _
  $region17: #{wacconv_forward.3} parent=0 // pred_fallthru
    _
  // Predicated region
  $region18: #{wacconv_forward.3} parent=0 // pred_check
    _
  $region19: #{wacconv_forward.3} parent=0 // pred_check_branch
    %20 = sbr.rel (0) target = $region21
  $region20: #{wacconv_forward.3} parent=0 // pred_region
    _
  $region21: #{wacconv_forward.3} parent=0 // pred_fallthru
    _
  // Predicated region
  $region22: #{wacconv_forward.3} parent=0 // pred_check
    _
  $region23: #{wacconv_forward.3} parent=0 // pred_check_branch
    %22 = sbr.rel (0) target = $region25
  $region24: #{wacconv_forward.3} parent=0 // pred_region
    _
  $region25: #{wacconv_forward.3} parent=0 // pred_fallthru
    _
  %v24 = vld [vmem:[%s0] sm:$0xff]
  %v25 = vld [vmem:[%s0 + $0x8] sm:$0xff]
  %v26 = vld [vmem:[%s0 + $0x10] sm:$0xff]
  %v27 = vld [vmem:[%s0 + $0x18] sm:$0xff]
  %v28 = vld [vmem:[%s0 + $0x20] sm:$0xff]
  %v29 = vld [vmem:[%s0 + $0x28] sm:$0xff]
  %v30 = vld [vmem:[%s0 + $0x30] sm:$0xff]
  %v31 = vld [vmem:[%s0 + $0x38] sm:$0xff]
  %v32 = vld [vmem:[%s0 + $0x40] sm:$0xff]
  %v33 = vld [vmem:[%s0 + $0x48] sm:$0xff]
  %v34 = vld [vmem:[%s0 + $0x50] sm:$0xff]
  %v35 = vld [vmem:[%s0 + $0x58] sm:$0xff]
  %v36 = vld [vmem:[%s0 + $0x60] sm:$0xff]
  %v37 = vld [vmem:[%s0 + $0x68] sm:$0xff]
  %v38 = vld [vmem:[%s0 + $0x70] sm:$0xff]
  %v39 = vld [vmem:[%s0 + $0x78] sm:$0xff]
  %v40 = vld [vmem:[%s1] sm:$0xff]
  %v41 = vld [vmem:[%s1 + $0x8] sm:$0xff]
  %v42 = vld [vmem:[%s1 + $0x10] sm:$0xff]
  %v43 = vld [vmem:[%s1 + $0x18] sm:$0xff]
  %v44 = vld [vmem:[%s1 + $0x20] sm:$0xff]
  %v45 = vld [vmem:[%s1 + $0x28] sm:$0xff]
  %v46 = vld [vmem:[%s1 + $0x30] sm:$0xff]
  %v47 = vld [vmem:[%s1 + $0x38] sm:$0xff]
  %v48 = vld [vmem:[%s1 + $0x40] sm:$0xff]
  %v49 = vld [vmem:[%s1 + $0x48] sm:$0xff]
  %v50 = vld [vmem:[%s1 + $0x50] sm:$0xff]
  %v51 = vld [vmem:[%s1 + $0x58] sm:$0xff]
  %v52 = vld [vmem:[%s1 + $0x60] sm:$0xff]
  %v53 = vld [vmem:[%s1 + $0x68] sm:$0xff]
  %v54 = vld [vmem:[%s1 + $0x70] sm:$0xff]
  %v55 = vld [vmem:[%s1 + $0x78] sm:$0xff]
  %v56 = vld [vmem:[%s2] sm:$0xff]
  %v57 = vld [vmem:[%s2 + $0x8] sm:$0xff]
  %v58 = vld [vmem:[%s2 + $0x10] sm:$0xff]
  %v59 = vld [vmem:[%s2 + $0x18] sm:$0xff]
  %v60 = vld [vmem:[%s2 + $0x20] sm:$0xff]
  %v61 = vld [vmem:[%s2 + $0x28] sm:$0xff]
  %v62 = vld [vmem:[%s2 + $0x30] sm:$0xff]
  %v63 = vld [vmem:[%s2 + $0x38] sm:$0xff]
  %v64 = vld [vmem:[%s2 + $0x40] sm:$0xff]
  %v65 = vld [vmem:[%s2 + $0x48] sm:$0xff]
  %v66 = vld [vmem:[%s2 + $0x50] sm:$0xff]
  %v67 = vld [vmem:[%s2 + $0x58] sm:$0xff]
  %v68 = vld [vmem:[%s2 + $0x60] sm:$0xff]
  %v69 = vld [vmem:[%s2 + $0x68] sm:$0xff]
  %v70 = vld [vmem:[%s2 + $0x70] sm:$0xff]
  %v71 = vld [vmem:[%s2 + $0x78] sm:$0xff]
  %v72 = vmul.f32 %v40, %v56
  %v73 = vmul.f32 %v41, %v57
  %v74 = vmul.f32 %v42, %v58
  %v75 = vmul.f32 %v43, %v59
  %v76 = vmul.f32 %v44, %v60
  %v77 = vmul.f32 %v45, %v61
  %v78 = vmul.f32 %v46, %v62
  %v79 = vmul.f32 %v47, %v63
  %v80 = vmul.f32 %v48, %v64
  %v81 = vmul.f32 %v49, %v65
  %v82 = vmul.f32 %v50, %v66
  %v83 = vmul.f32 %v51, %v67
  %v84 = vmul.f32 %v52, %v68
  %v85 = vmul.f32 %v53, %v69
  %v86 = vmul.f32 %v54, %v70
  %v87 = vmul.f32 %v55, %v71
  %v88 = vld [vmem:[%s3] sm:$0xff]
  %v89 = vld [vmem:[%s3 + $0x8] sm:$0xff]
  %v90 = vld [vmem:[%s3 + $0x10] sm:$0xff]
  %v91 = vld [vmem:[%s3 + $0x18] sm:$0xff]
  %v92 = vld [vmem:[%s3 + $0x20] sm:$0xff]
  %v93 = vld [vmem:[%s3 + $0x28] sm:$0xff]
  %v94 = vld [vmem:[%s3 + $0x30] sm:$0xff]
  %v95 = vld [vmem:[%s3 + $0x38] sm:$0xff]
  %v96 = vld [vmem:[%s3 + $0x40] sm:$0xff]
  %v97 = vld [vmem:[%s3 + $0x48] sm:$0xff]
  %v98 = vld [vmem:[%s3 + $0x50] sm:$0xff]
  %v99 = vld [vmem:[%s3 + $0x58] sm:$0xff]
  %v100 = vld [vmem:[%s3 + $0x60] sm:$0xff]
  %v101 = vld [vmem:[%s3 + $0x68] sm:$0xff]
  %v102 = vld [vmem:[%s3 + $0x70] sm:$0xff]
  %v103 = vld [vmem:[%s3 + $0x78] sm:$0xff]
  %v104 = vadd.f32 %v72, %v88
  %v105 = vadd.f32 %v73, %v89
  %v106 = vadd.f32 %v74, %v90
  %v107 = vadd.f32 %v75, %v91
  %v108 = vadd.f32 %v76, %v92
  %v109 = vadd.f32 %v77, %v93
  %v110 = vadd.f32 %v78, %v94
  %v111 = vadd.f32 %v79, %v95
  %v112 = vadd.f32 %v80, %v96
  %v113 = vadd.f32 %v81, %v97
  %v114 = vadd.f32 %v82, %v98
  %v115 = vadd.f32 %v83, %v99
  %v116 = vadd.f32 %v84, %v100
  %v117 = vadd.f32 %v85, %v101
  %v118 = vadd.f32 %v86, %v102
  %v119 = vadd.f32 %v87, %v103
  %v120 = vmul.f32 %v24, %v104
  %v121 = vmul.f32 %v25, %v105
  %v122 = vmul.f32 %v26, %v106
  %v123 = vmul.f32 %v27, %v107
  %v124 = vmul.f32 %v28, %v108
  %v125 = vmul.f32 %v29, %v109
  %v126 = vmul.f32 %v30, %v110
  %v127 = vmul.f32 %v31, %v111
  %v128 = vmul.f32 %v32, %v112
  %v129 = vmul.f32 %v33, %v113
  %v130 = vmul.f32 %v34, %v114
  %v131 = vmul.f32 %v35, %v115
  %v132 = vmul.f32 %v36, %v116
  %v133 = vmul.f32 %v37, %v117
  %v134 = vmul.f32 %v38, %v118
  %v135 = vmul.f32 %v39, %v119
  %v136 = vpack.c.bf16 %v121, %v120
  %v137 = vpack.c.bf16 %v123, %v122
  %v138 = vpack.c.bf16 %v125, %v124
  %v139 = vpack.c.bf16 %v127, %v126
  %v140 = vpack.c.bf16 %v129, %v128
  %v141 = vpack.c.bf16 %v131, %v130
  %v142 = vpack.c.bf16 %v133, %v132
  %v143 = vpack.c.bf16 %v135, %v134
  %v144 = vld [vmem:[%s5] sm:$0xf]
  %v145 = vld [vmem:[%s5 + $0x4] sm:$0xf]
  %v146 = vld [vmem:[%s5 + $0x8] sm:$0xf]
  %v147 = vld [vmem:[%s5 + $0xc] sm:$0xf]
  %v152 = vunpack.c.l.b16 %v144
  %v153 = vunpack.c.l.b16 %v145
  %v154 = vunpack.c.l.b16 %v146
  %v155 = vunpack.c.l.b16 %v147
  %v156 = vpack.c.b16 %v153, %v152
  %v157 = vpack.c.b16 %v155, %v154
  %vm160 = vcmask 261120
  %v162 = vsel %vm160, %v136, 0
  %v165 = vsel %vm160, %v137, 0
  %v168 = vsel %vm160, %v138, 0
  %v171 = vsel %vm160, %v139, 0
  %v174 = vsel %vm160, %v140, 0
  %v177 = vsel %vm160, %v141, 0
  %v180 = vsel %vm160, %v142, 0
  %v183 = vsel %vm160, %v143, 0
  %185 = vmatprep.subr.bf16.mxu0 0
  %186 = vmatpush1.bf16.msra.mxu0 %v156
  %187 = vmatprep.subr.bf16.mxu0 0
  %188 = vmatpush1.bf16.msra.mxu0 %v157
  %189 = vmatprep.subr.bf16.mxu0 0
  %190 = vmatpush1.bf16.msra.mxu0 0
  %191 = vmatprep.subr.bf16.mxu0 0
  %192 = vmatpush1.bf16.msra.mxu0 0
  %193 = vmatprep.subr.bf16.mxu0 0
  %194 = vmatpush1.bf16.msra.mxu0 0
  %195 = vmatprep.subr.bf16.mxu0 0
  %196 = vmatpush1.bf16.msra.mxu0 0
  %197 = vmatprep.subr.bf16.mxu0 0
  %198 = vmatpush1.bf16.msra.mxu0 0
  %199 = vmatprep.subr.bf16.mxu0 0
  %200 = vmatpush1.bf16.msra.mxu0 0
  %201 = vmatprep.subr.bf16.mxu0 0
  %202 = vmatpush1.bf16.msra.mxu0 0
  %203 = vmatprep.subr.bf16.mxu0 0
  %204 = vmatpush1.bf16.msra.mxu0 0
  %205 = vmatprep.subr.bf16.mxu0 0
  %206 = vmatpush1.bf16.msra.mxu0 0
  %207 = vmatprep.subr.bf16.mxu0 0
  %208 = vmatpush1.bf16.msra.mxu0 0
  %209 = vmatprep.subr.bf16.mxu0 0
  %210 = vmatpush1.bf16.msra.mxu0 0
  %211 = vmatprep.subr.bf16.mxu0 0
  %212 = vmatpush1.bf16.msra.mxu0 0
  %213 = vmatprep.subr.bf16.mxu0 0
  %214 = vmatpush1.bf16.msra.mxu0 0
  %215 = vmatprep.subr.bf16.mxu0 0
  %216 = vmatpush1.bf16.msra.mxu0 0
  %217 = vmatprep.mubr.bf16.mxu0 0
  %218 = vmatmul.mubr.bf16.gmra.mrb[0].mxu0 %v162
  %v219 = vpop.f32.mrb[0].mxu0
  %v220 = vadd.f32 0.0, %v219
  %v221 = vpop.f32.mrb[0].mxu0
  %v222 = vpop.f32.mrb[0].mxu0
  %v223 = vadd.f32 0.0, %v222
  %v224 = vpop.f32.mrb[0].mxu0
  %225 = vmatprep.mubr.bf16.mxu0 0
  %226 = vmatmul.mubr.bf16.gmra.mrb[0].mxu0 %v165
  %v227 = vpop.f32.mrb[0].mxu0
  %v228 = vadd.f32 0.0, %v227
  %v229 = vpop.f32.mrb[0].mxu0
  %v230 = vpop.f32.mrb[0].mxu0
  %v231 = vadd.f32 0.0, %v230
  %v232 = vpop.f32.mrb[0].mxu0
  %233 = vmatprep.mubr.bf16.mxu0 0
  %234 = vmatmul.mubr.bf16.gmra.mrb[0].mxu0 %v168
  %v235 = vpop.f32.mrb[0].mxu0
  %v236 = vadd.f32 0.0, %v235
  %v237 = vpop.f32.mrb[0].mxu0
  %v238 = vpop.f32.mrb[0].mxu0
  %v239 = vadd.f32 0.0, %v238
  %v240 = vpop.f32.mrb[0].mxu0
  %241 = vmatprep.mubr.bf16.mxu0 0
  %242 = vmatmul.mubr.bf16.gmra.mrb[0].mxu0 %v171
  %v243 = vpop.f32.mrb[0].mxu0
  %v244 = vadd.f32 0.0, %v243
  %v245 = vpop.f32.mrb[0].mxu0
  %v246 = vpop.f32.mrb[0].mxu0
  %v247 = vadd.f32 0.0, %v246
  %v248 = vpop.f32.mrb[0].mxu0
  %249 = vmatprep.mubr.bf16.mxu0 0
  %250 = vmatmul.mubr.bf16.gmra.mrb[0].mxu0 %v174
  %v251 = vpop.f32.mrb[0].mxu0
  %v252 = vadd.f32 0.0, %v251
  %v253 = vpop.f32.mrb[0].mxu0
  %v254 = vpop.f32.mrb[0].mxu0
  %v255 = vadd.f32 0.0, %v254
  %v256 = vpop.f32.mrb[0].mxu0
  %257 = vmatprep.mubr.bf16.mxu0 0
  %258 = vmatmul.mubr.bf16.gmra.mrb[0].mxu0 %v177
  %v259 = vpop.f32.mrb[0].mxu0
  %v260 = vadd.f32 0.0, %v259
  %v261 = vpop.f32.mrb[0].mxu0
  %v262 = vpop.f32.mrb[0].mxu0
  %v263 = vadd.f32 0.0, %v262
  %v264 = vpop.f32.mrb[0].mxu0
  %265 = vmatprep.mubr.bf16.mxu0 0
  %266 = vmatmul.mubr.bf16.gmra.mrb[0].mxu0 %v180
  %v267 = vpop.f32.mrb[0].mxu0
  %v268 = vadd.f32 0.0, %v267
  %v269 = vpop.f32.mrb[0].mxu0
  %v270 = vpop.f32.mrb[0].mxu0
  %v271 = vadd.f32 0.0, %v270
  %v272 = vpop.f32.mrb[0].mxu0
  %273 = vmatprep.mubr.bf16.mxu0 0
  %274 = vmatmul.mubr.bf16.gmra.mrb[0].mxu0 %v183
  %v275 = vpop.f32.mrb[0].mxu0
  %v276 = vadd.f32 0.0, %v275
  %v277 = vpop.f32.mrb[0].mxu0
  %v278 = vpop.f32.mrb[0].mxu0
  %v279 = vadd.f32 0.0, %v278
  %v280 = vpop.f32.mrb[0].mxu0
  %281 = vdwg.mxu0
  %v282 = vld [vmem:[%s4] sm:$0xff]
  %v283 = vld [vmem:[%s4 + $0x8] sm:$0xff]
  %v284 = vld [vmem:[%s4 + $0x10] sm:$0xff]
  %v285 = vld [vmem:[%s4 + $0x18] sm:$0xff]
  %v286 = vld [vmem:[%s4 + $0x20] sm:$0xff]
  %v287 = vld [vmem:[%s4 + $0x28] sm:$0xff]
  %v288 = vld [vmem:[%s4 + $0x30] sm:$0xff]
  %v289 = vld [vmem:[%s4 + $0x38] sm:$0xff]
  %v290 = vld [vmem:[%s4 + $0x40] sm:$0xff]
  %v291 = vld [vmem:[%s4 + $0x48] sm:$0xff]
  %v292 = vld [vmem:[%s4 + $0x50] sm:$0xff]
  %v293 = vld [vmem:[%s4 + $0x58] sm:$0xff]
  %v294 = vld [vmem:[%s4 + $0x60] sm:$0xff]
  %v295 = vld [vmem:[%s4 + $0x68] sm:$0xff]
  %v296 = vld [vmem:[%s4 + $0x70] sm:$0xff]
  %v297 = vld [vmem:[%s4 + $0x78] sm:$0xff]
  %299 = vset.pattern.permute.xlu0 0
  %300 = vperm.xlu0 %299, %v282
  %v301 = vpop.permute.xlu0 %300
  %304 = vset.pattern.permute.xlu0 0
  %305 = vperm.xlu0 %304, %v283
  %v306 = vpop.permute.xlu0 %305
  %309 = vset.pattern.permute.xlu0 0
  %310 = vperm.xlu0 %309, %v284
  %v311 = vpop.permute.xlu0 %310
  %314 = vset.pattern.permute.xlu0 0
  %315 = vperm.xlu0 %314, %v285
  %v316 = vpop.permute.xlu0 %315
  %319 = vset.pattern.permute.xlu0 0
  %320 = vperm.xlu0 %319, %v286
  %v321 = vpop.permute.xlu0 %320
  %324 = vset.pattern.permute.xlu0 0
  %325 = vperm.xlu0 %324, %v287
  %v326 = vpop.permute.xlu0 %325
  %329 = vset.pattern.permute.xlu0 0
  %330 = vperm.xlu0 %329, %v288
  %v331 = vpop.permute.xlu0 %330
  %334 = vset.pattern.permute.xlu0 0
  %335 = vperm.xlu0 %334, %v289
  %v336 = vpop.permute.xlu0 %335
  %339 = vset.pattern.permute.xlu0 0
  %340 = vperm.xlu0 %339, %v290
  %v341 = vpop.permute.xlu0 %340
  %344 = vset.pattern.permute.xlu0 0
  %345 = vperm.xlu0 %344, %v291
  %v346 = vpop.permute.xlu0 %345
  %349 = vset.pattern.permute.xlu0 0
  %350 = vperm.xlu0 %349, %v292
  %v351 = vpop.permute.xlu0 %350
  %354 = vset.pattern.permute.xlu0 0
  %355 = vperm.xlu0 %354, %v293
  %v356 = vpop.permute.xlu0 %355
  %359 = vset.pattern.permute.xlu0 0
  %360 = vperm.xlu0 %359, %v294
  %v361 = vpop.permute.xlu0 %360
  %364 = vset.pattern.permute.xlu0 0
  %365 = vperm.xlu0 %364, %v295
  %v366 = vpop.permute.xlu0 %365
  %369 = vset.pattern.permute.xlu0 0
  %370 = vperm.xlu0 %369, %v296
  %v371 = vpop.permute.xlu0 %370
  %374 = vset.pattern.permute.xlu0 0
  %375 = vperm.xlu0 %374, %v297
  %v376 = vpop.permute.xlu0 %375
  %v378 = vmul.f32 %v220, %v301
  %v379 = vmul.f32 %v223, %v306
  %v380 = vmul.f32 %v228, %v311
  %v381 = vmul.f32 %v231, %v316
  %v382 = vmul.f32 %v236, %v321
  %v383 = vmul.f32 %v239, %v326
  %v384 = vmul.f32 %v244, %v331
  %v385 = vmul.f32 %v247, %v336
  %v386 = vmul.f32 %v252, %v341
  %v387 = vmul.f32 %v255, %v346
  %v388 = vmul.f32 %v260, %v351
  %v389 = vmul.f32 %v263, %v356
  %v390 = vmul.f32 %v268, %v361
  %v391 = vmul.f32 %v271, %v366
  %v392 = vmul.f32 %v276, %v371
  %v393 = vmul.f32 %v279, %v376
  %v394 = vpack.c.bf16 %v379, %v378
  %v395 = vpack.c.bf16 %v381, %v380
  %v396 = vpack.c.bf16 %v383, %v382
  %v397 = vpack.c.bf16 %v385, %v384
  %v398 = vpack.c.bf16 %v387, %v386
  %v399 = vpack.c.bf16 %v389, %v388
  %v400 = vpack.c.bf16 %v391, %v390
  %v401 = vpack.c.bf16 %v393, %v392
  %v410 = vunpack.c.l.b16 %v394
  %v411 = vunpack.c.h.b16 %v394
  %v412 = vunpack.c.l.b16 %v395
  %v413 = vunpack.c.h.b16 %v395
  %v414 = vunpack.c.l.b16 %v396
  %v415 = vunpack.c.h.b16 %v396
  %v416 = vunpack.c.l.b16 %v397
  %v417 = vunpack.c.h.b16 %v397
  %v418 = vunpack.c.l.b16 %v398
  %v419 = vunpack.c.h.b16 %v398
  %v420 = vunpack.c.l.b16 %v399
  %v421 = vunpack.c.h.b16 %v399
  %v422 = vunpack.c.l.b16 %v400
  %v423 = vunpack.c.h.b16 %v400
  %v424 = vunpack.c.l.b16 %v401
  %v425 = vunpack.c.h.b16 %v401
  %v426 = vpack.c.b16 %v410, %v410
  %v427 = vpack.c.b16 %v411, %v411
  %v428 = vpack.c.b16 %v412, %v412
  %v429 = vpack.c.b16 %v413, %v413
  %v430 = vpack.c.b16 %v414, %v414
  %v431 = vpack.c.b16 %v415, %v415
  %v432 = vpack.c.b16 %v416, %v416
  %v433 = vpack.c.b16 %v417, %v417
  %v434 = vpack.c.b16 %v418, %v418
  %v435 = vpack.c.b16 %v419, %v419
  %v436 = vpack.c.b16 %v420, %v420
  %v437 = vpack.c.b16 %v421, %v421
  %v438 = vpack.c.b16 %v422, %v422
  %v439 = vpack.c.b16 %v423, %v423
  %v440 = vpack.c.b16 %v424, %v424
  %v441 = vpack.c.b16 %v425, %v425
  %458 = vst [vmem:[%s6] sm:$0xf] %v426
  %459 = vst [vmem:[%s6 + $0x4] sm:$0xf] %v427
  %460 = vst [vmem:[%s6 + $0x8] sm:$0xf] %v428
  %461 = vst [vmem:[%s6 + $0xc] sm:$0xf] %v429
  %462 = vst [vmem:[%s6 + $0x10] sm:$0xf] %v430
  %463 = vst [vmem:[%s6 + $0x14] sm:$0xf] %v431
  %464 = vst [vmem:[%s6 + $0x18] sm:$0xf] %v432
  %465 = vst [vmem:[%s6 + $0x1c] sm:$0xf] %v433
  %466 = vst [vmem:[%s6 + $0x20] sm:$0xf] %v434
  %467 = vst [vmem:[%s6 + $0x24] sm:$0xf] %v435
  %468 = vst [vmem:[%s6 + $0x28] sm:$0xf] %v436
  %469 = vst [vmem:[%s6 + $0x2c] sm:$0xf] %v437
  %470 = vst [vmem:[%s6 + $0x30] sm:$0xf] %v438
  %471 = vst [vmem:[%s6 + $0x34] sm:$0xf] %v439
  %472 = vst [vmem:[%s6 + $0x38] sm:$0xf] %v440
  %473 = vst [vmem:[%s6 + $0x3c] sm:$0xf] %v441
  // Predicated region
  $region26: #{wacconv_forward.3} parent=0 // pred_check
    _
  $region27: #{wacconv_forward.3} parent=0 // pred_check_branch
    %475 = sbr.rel (0) target = $region29
  $region28: #{wacconv_forward.3} parent=0 // pred_region
    _
  $region29: #{wacconv_forward.3} parent=0 // pred_fallthru
    _
  // Predicated region
  $region30: #{wacconv_forward.3} parent=0 // pred_check
    _
  $region31: #{wacconv_forward.3} parent=0 // pred_check_branch
    %477 = sbr.rel (0) target = $region33
  $region32: #{wacconv_forward.3} parent=0 // pred_region
    _
  $region33: #{wacconv_forward.3} parent=0 // pred_fallthru
    _

// kernel: wacconv_forward.4
$region0: #{wacconv_forward.4}
  #allocation0 [shape = 'u32[]', space=smem, size = 0x4, offset = 0x4, fixed_abs, tag = 'smem constant byte address 0x4 - core index']
  #allocation1 [shape = 'u32[144,128]{1,0:T(1,128)}', space=vmem, size = 0x12000, scoped, tag = 'internal scratch']
  #allocation2 [shape = 'f32[128,128]{1,0:T(8,128)}', space=vmem, size = 0x10000, scoped, tag = 'scratch operand']
  %s0 = inlined_call_operand.vmem [shape: s32[1,128], index: 0, kind: input, shape index: {}]
  %s1 = inlined_call_operand.vmem [shape: bf16[128,128], index: 1, kind: input, shape index: {}]
  %s2 = inlined_call_operand.vmem [shape: f32[128,32], index: 2, kind: input, shape index: {}]
  %s3 = inlined_call_operand.vmem [shape: f32[128,32], index: 3, kind: input, shape index: {}]
  %s4 = inlined_call_operand.vmem [shape: f32[1,32], index: 4, kind: input, shape index: {}]
  %s5 = inlined_call_operand.vmem [shape: bf16[32,128], index: 5, kind: input, shape index: {}]
  %s6 = inlined_call_operand.vmem [shape: f32[1,128], index: 6, kind: input, shape index: {}]
  %s7 = inlined_call_operand.vmem [shape: f32[1,128], index: 7, kind: input, shape index: {}]
  %s8 = inlined_call_operand.vmem [shape: f32[1,128], index: 8, kind: input, shape index: {}]
  %s9 = inlined_call_operand.vmem [shape: f32[128,128], index: 9, kind: output, shape index: {}]
  %s10 = sld [smem:[#allocation0]]
  $region54: #{wacconv_forward.4} parent=0
    _
  %s12 = ssub.s32 1, %s10
  %s13 = scalar_select 0, %s12, %s10
  // Predicated region
  $region2: #{wacconv_forward.4} parent=0 // pred_check
    _
  $region3: #{wacconv_forward.4} parent=0 // pred_check_branch
    %15 = sbr.rel (0) target = $region5
  $region4: #{wacconv_forward.4} parent=0 // pred_region
    _
  $region5: #{wacconv_forward.4} parent=0 // pred_fallthru
    _
  // Predicated region
  $region6: #{wacconv_forward.4} parent=0 // pred_check
    _
  $region7: #{wacconv_forward.4} parent=0 // pred_check_branch
    %17 = sbr.rel (0) target = $region9
  $region8: #{wacconv_forward.4} parent=0 // pred_region
    _
  $region9: #{wacconv_forward.4} parent=0 // pred_fallthru
    _
  // Predicated region
  $region10: #{wacconv_forward.4} parent=0 // pred_check
    _
  $region11: #{wacconv_forward.4} parent=0 // pred_check_branch
    %19 = sbr.rel (0) target = $region13
  $region12: #{wacconv_forward.4} parent=0 // pred_region
    _
  $region13: #{wacconv_forward.4} parent=0 // pred_fallthru
    _
  // Predicated region
  $region14: #{wacconv_forward.4} parent=0 // pred_check
    _
  $region15: #{wacconv_forward.4} parent=0 // pred_check_branch
    %21 = sbr.rel (0) target = $region17
  $region16: #{wacconv_forward.4} parent=0 // pred_region
    _
  $region17: #{wacconv_forward.4} parent=0 // pred_fallthru
    _
  // Predicated region
  $region18: #{wacconv_forward.4} parent=0 // pred_check
    _
  $region19: #{wacconv_forward.4} parent=0 // pred_check_branch
    %23 = sbr.rel (0) target = $region21
  $region20: #{wacconv_forward.4} parent=0 // pred_region
    _
  $region21: #{wacconv_forward.4} parent=0 // pred_fallthru
    _
  // Predicated region
  $region22: #{wacconv_forward.4} parent=0 // pred_check
    _
  $region23: #{wacconv_forward.4} parent=0 // pred_check_branch
    %25 = sbr.rel (0) target = $region25
  $region24: #{wacconv_forward.4} parent=0 // pred_region
    _
  $region25: #{wacconv_forward.4} parent=0 // pred_fallthru
    _
  // Predicated region
  $region26: #{wacconv_forward.4} parent=0 // pred_check
    _
  $region27: #{wacconv_forward.4} parent=0 // pred_check_branch
    %27 = sbr.rel (0) target = $region29
  $region28: #{wacconv_forward.4} parent=0 // pred_region
    _
  $region29: #{wacconv_forward.4} parent=0 // pred_fallthru
    _
  // Predicated region
  $region30: #{wacconv_forward.4} parent=0 // pred_check
    _
  $region31: #{wacconv_forward.4} parent=0 // pred_check_branch
    %29 = sbr.rel (0) target = $region33
  $region32: #{wacconv_forward.4} parent=0 // pred_region
    _
  $region33: #{wacconv_forward.4} parent=0 // pred_fallthru
    _
  // Predicated region
  $region34: #{wacconv_forward.4} parent=0 // pred_check
    _
  $region35: #{wacconv_forward.4} parent=0 // pred_check_branch
    %31 = sbr.rel (0) target = $region37
  $region36: #{wacconv_forward.4} parent=0 // pred_region
    _
  $region37: #{wacconv_forward.4} parent=0 // pred_fallthru
    _
  %p33 = scmp.eq.s32.totalorder 0, 0
  // Predicated region
  $region38: #{wacconv_forward.4} parent=0 // pred_check
    %p34 = pneg %p33
  $region39: #{wacconv_forward.4} parent=0 // pred_check_branch
    %36 = sbr.rel (%p34) target = $region41
  $region40: #{wacconv_forward.4} parent=0 // pred_region
    %37 = vst [vmem:[#allocation2] sm:$0xff] 0.0
    %38 = vst [vmem:[#allocation2 + $0x8] sm:$0xff] 0.0
    %39 = vst [vmem:[#allocation2 + $0x10] sm:$0xff] 0.0
    %40 = vst [vmem:[#allocation2 + $0x18] sm:$0xff] 0.0
    %41 = vst [vmem:[#allocation2 + $0x20] sm:$0xff] 0.0
    %42 = vst [vmem:[#allocation2 + $0x28] sm:$0xff] 0.0
    %43 = vst [vmem:[#allocation2 + $0x30] sm:$0xff] 0.0
    %44 = vst [vmem:[#allocation2 + $0x38] sm:$0xff] 0.0
    %45 = vst [vmem:[#allocation2 + $0x40] sm:$0xff] 0.0
    %46 = vst [vmem:[#allocation2 + $0x48] sm:$0xff] 0.0
    %47 = vst [vmem:[#allocation2 + $0x50] sm:$0xff] 0.0
    %48 = vst [vmem:[#allocation2 + $0x58] sm:$0xff] 0.0
    %49 = vst [vmem:[#allocation2 + $0x60] sm:$0xff] 0.0
    %50 = vst [vmem:[#allocation2 + $0x68] sm:$0xff] 0.0
    %51 = vst [vmem:[#allocation2 + $0x70] sm:$0xff] 0.0
    %52 = vst [vmem:[#allocation2 + $0x78] sm:$0xff] 0.0
  $region41: #{wacconv_forward.4} parent=0 // pred_fallthru
    _
  %v53 = vlaneseq
  %v54 = vshrl.u32 %v53, 7
  %v55 = vadd.s32 %v54, 8
  %v56 = vadd.s32 %v54, 16
  %v57 = vadd.s32 %v54, 24
  %v58 = vadd.s32 %v54, 32
  %v59 = vadd.s32 %v54, 40
  %v60 = vadd.s32 %v54, 48
  %v61 = vadd.s32 %v54, 56
  %v62 = vadd.s32 %v54, 64
  %v63 = vadd.s32 %v54, 72
  %v64 = vadd.s32 %v54, 80
  %v65 = vadd.s32 %v54, 88
  %v66 = vadd.s32 %v54, 96
  %v67 = vadd.s32 %v54, 104
  %v68 = vadd.s32 %v54, 112
  %v69 = vadd.s32 %v54, 120
  %s70 = smul.u32 0, 128
  %v71 = vstv %s70
  %v72 = vadd.s32 %v54, %v71
  %v73 = vadd.s32 %v55, %v71
  %v74 = vadd.s32 %v56, %v71
  %v75 = vadd.s32 %v57, %v71
  %v76 = vadd.s32 %v58, %v71
  %v77 = vadd.s32 %v59, %v71
  %v78 = vadd.s32 %v60, %v71
  %v79 = vadd.s32 %v61, %v71
  %v80 = vadd.s32 %v62, %v71
  %v81 = vadd.s32 %v63, %v71
  %v82 = vadd.s32 %v64, %v71
  %v83 = vadd.s32 %v65, %v71
  %v84 = vadd.s32 %v66, %v71
  %v85 = vadd.s32 %v67, %v71
  %v86 = vadd.s32 %v68, %v71
  %v87 = vadd.s32 %v69, %v71
  %v88 = vld [vmem:[%s0] sm:$0x1]
  %v89 = vlaneseq
  %v90 = vshrl.u32 %v89, 7
  %v91 = vsub.s32 0, %v90
  %v92 = vrot.slane %v88, %v91
  %vm93 = vcmp.eq.s32.totalorder %v72, %v92
  %vm94 = vcmp.eq.s32.totalorder %v73, %v92
  %vm95 = vcmp.eq.s32.totalorder %v74, %v92
  %vm96 = vcmp.eq.s32.totalorder %v75, %v92
  %vm97 = vcmp.eq.s32.totalorder %v76, %v92
  %vm98 = vcmp.eq.s32.totalorder %v77, %v92
  %vm99 = vcmp.eq.s32.totalorder %v78, %v92
  %vm100 = vcmp.eq.s32.totalorder %v79, %v92
  %vm101 = vcmp.eq.s32.totalorder %v80, %v92
  %vm102 = vcmp.eq.s32.totalorder %v81, %v92
  %vm103 = vcmp.eq.s32.totalorder %v82, %v92
  %vm104 = vcmp.eq.s32.totalorder %v83, %v92
  %vm105 = vcmp.eq.s32.totalorder %v84, %v92
  %vm106 = vcmp.eq.s32.totalorder %v85, %v92
  %vm107 = vcmp.eq.s32.totalorder %v86, %v92
  %vm108 = vcmp.eq.s32.totalorder %v87, %v92
  %v109 = vsel %vm93, 1, 0
  %v110 = vsel %vm94, 1, 0
  %v111 = vsel %vm95, 1, 0
  %v112 = vsel %vm96, 1, 0
  %v113 = vsel %vm97, 1, 0
  %v114 = vsel %vm98, 1, 0
  %v115 = vsel %vm99, 1, 0
  %v116 = vsel %vm100, 1, 0
  %v117 = vsel %vm101, 1, 0
  %v118 = vsel %vm102, 1, 0
  %v119 = vsel %vm103, 1, 0
  %v120 = vsel %vm104, 1, 0
  %v121 = vsel %vm105, 1, 0
  %v122 = vsel %vm106, 1, 0
  %v123 = vsel %vm107, 1, 0
  %v124 = vsel %vm108, 1, 0
  %v125 = vcvt.s32.f32 %v109
  %v126 = vcvt.s32.f32 %v110
  %v127 = vcvt.s32.f32 %v111
  %v128 = vcvt.s32.f32 %v112
  %v129 = vcvt.s32.f32 %v113
  %v130 = vcvt.s32.f32 %v114
  %v131 = vcvt.s32.f32 %v115
  %v132 = vcvt.s32.f32 %v116
  %v133 = vcvt.s32.f32 %v117
  %v134 = vcvt.s32.f32 %v118
  %v135 = vcvt.s32.f32 %v119
  %v136 = vcvt.s32.f32 %v120
  %v137 = vcvt.s32.f32 %v121
  %v138 = vcvt.s32.f32 %v122
  %v139 = vcvt.s32.f32 %v123
  %v140 = vcvt.s32.f32 %v124
  %v141 = vpack.c.bf16 %v126, %v125
  %v142 = vpack.c.bf16 %v128, %v127
  %v143 = vpack.c.bf16 %v130, %v129
  %v144 = vpack.c.bf16 %v132, %v131
  %v145 = vpack.c.bf16 %v134, %v133
  %v146 = vpack.c.bf16 %v136, %v135
  %v147 = vpack.c.bf16 %v138, %v137
  %v148 = vpack.c.bf16 %v140, %v139
  %v149 = vld [vmem:[#allocation2] sm:$0xff]
  %v150 = vld [vmem:[#allocation2 + $0x8] sm:$0xff]
  %v151 = vld [vmem:[#allocation2 + $0x10] sm:$0xff]
  %v152 = vld [vmem:[#allocation2 + $0x18] sm:$0xff]
  %v153 = vld [vmem:[#allocation2 + $0x20] sm:$0xff]
  %v154 = vld [vmem:[#allocation2 + $0x28] sm:$0xff]
  %v155 = vld [vmem:[#allocation2 + $0x30] sm:$0xff]
  %v156 = vld [vmem:[#allocation2 + $0x38] sm:$0xff]
  %v157 = vld [vmem:[#allocation2 + $0x40] sm:$0xff]
  %v158 = vld [vmem:[#allocation2 + $0x48] sm:$0xff]
  %v159 = vld [vmem:[#allocation2 + $0x50] sm:$0xff]
  %v160 = vld [vmem:[#allocation2 + $0x58] sm:$0xff]
  %v161 = vld [vmem:[#allocation2 + $0x60] sm:$0xff]
  %v162 = vld [vmem:[#allocation2 + $0x68] sm:$0xff]
  %v163 = vld [vmem:[#allocation2 + $0x70] sm:$0xff]
  %v164 = vld [vmem:[#allocation2 + $0x78] sm:$0xff]
  %v165 = vld [vmem:[%s1] sm:$0xf]
  %v166 = vld [vmem:[%s1 + $0x4] sm:$0xf]
  %v167 = vld [vmem:[%s1 + $0x8] sm:$0xf]
  %v168 = vld [vmem:[%s1 + $0xc] sm:$0xf]
  %v169 = vld [vmem:[%s1 + $0x10] sm:$0xf]
  %v170 = vld [vmem:[%s1 + $0x14] sm:$0xf]
  %v171 = vld [vmem:[%s1 + $0x18] sm:$0xf]
  %v172 = vld [vmem:[%s1 + $0x1c] sm:$0xf]
  %v173 = vld [vmem:[%s1 + $0x20] sm:$0xf]
  %v174 = vld [vmem:[%s1 + $0x24] sm:$0xf]
  %v175 = vld [vmem:[%s1 + $0x28] sm:$0xf]
  %v176 = vld [vmem:[%s1 + $0x2c] sm:$0xf]
  %v177 = vld [vmem:[%s1 + $0x30] sm:$0xf]
  %v178 = vld [vmem:[%s1 + $0x34] sm:$0xf]
  %v179 = vld [vmem:[%s1 + $0x38] sm:$0xf]
  %v180 = vld [vmem:[%s1 + $0x3c] sm:$0xf]
  %v197 = vunpack.c.l.b16 %v165
  %v198 = vunpack.c.l.b16 %v166
  %v199 = vunpack.c.l.b16 %v167
  %v200 = vunpack.c.l.b16 %v168
  %v201 = vunpack.c.l.b16 %v169
  %v202 = vunpack.c.l.b16 %v170
  %v203 = vunpack.c.l.b16 %v171
  %v204 = vunpack.c.l.b16 %v172
  %v205 = vunpack.c.l.b16 %v173
  %v206 = vunpack.c.l.b16 %v174
  %v207 = vunpack.c.l.b16 %v175
  %v208 = vunpack.c.l.b16 %v176
  %v209 = vunpack.c.l.b16 %v177
  %v210 = vunpack.c.l.b16 %v178
  %v211 = vunpack.c.l.b16 %v179
  %v212 = vunpack.c.l.b16 %v180
  %v213 = vpack.c.b16 %v198, %v197
  %v214 = vpack.c.b16 %v200, %v199
  %v215 = vpack.c.b16 %v202, %v201
  %v216 = vpack.c.b16 %v204, %v203
  %v217 = vpack.c.b16 %v206, %v205
  %v218 = vpack.c.b16 %v208, %v207
  %v219 = vpack.c.b16 %v210, %v209
  %v220 = vpack.c.b16 %v212, %v211
  %229 = vmatprep.subr.bf16.mxu0 0
  %230 = vmatpush1.bf16.msra.mxu0 %v213
  %231 = vmatprep.subr.bf16.mxu0 0
  %232 = vmatpush1.bf16.msra.mxu0 %v214
  %233 = vmatprep.subr.bf16.mxu0 0
  %234 = vmatpush1.bf16.msra.mxu0 %v215
  %235 = vmatprep.subr.bf16.mxu0 0
  %236 = vmatpush1.bf16.msra.mxu0 %v216
  %237 = vmatprep.subr.bf16.mxu0 0
  %238 = vmatpush1.bf16.msra.mxu0 %v217
  %239 = vmatprep.subr.bf16.mxu0 0
  %240 = vmatpush1.bf16.msra.mxu0 %v218
  %241 = vmatprep.subr.bf16.mxu0 0
  %242 = vmatpush1.bf16.msra.mxu0 %v219
  %243 = vmatprep.subr.bf16.mxu0 0
  %244 = vmatpush1.bf16.msra.mxu0 %v220
  %245 = vmatprep.subr.bf16.mxu0 0
  %246 = vmatpush1.bf16.msra.mxu0 0
  %247 = vmatprep.subr.bf16.mxu0 0
  %248 = vmatpush1.bf16.msra.mxu0 0
  %249 = vmatprep.subr.bf16.mxu0 0
  %250 = vmatpush1.bf16.msra.mxu0 0
  %251 = vmatprep.subr.bf16.mxu0 0
  %252 = vmatpush1.bf16.msra.mxu0 0
  %253 = vmatprep.subr.bf16.mxu0 0
  %254 = vmatpush1.bf16.msra.mxu0 0
  %255 = vmatprep.subr.bf16.mxu0 0
  %256 = vmatpush1.bf16.msra.mxu0 0
  %257 = vmatprep.subr.bf16.mxu0 0
  %258 = vmatpush1.bf16.msra.mxu0 0
  %259 = vmatprep.subr.bf16.mxu0 0
  %260 = vmatpush1.bf16.msra.mxu0 0
  %261 = vmatprep.mubr.bf16.mxu0 0
  %262 = vmatmul.mubr.bf16.gmra.mrb[0].mxu0 %v141
  %v263 = vpop.f32.mrb[0].mxu0
  %v264 = vadd.f32 0.0, %v263
  %v265 = vpop.f32.mrb[0].mxu0
  %v266 = vpop.f32.mrb[0].mxu0
  %v267 = vadd.f32 0.0, %v266
  %v268 = vpop.f32.mrb[0].mxu0
  %269 = vmatprep.mubr.bf16.mxu0 0
  %270 = vmatmul.mubr.bf16.gmra.mrb[0].mxu0 %v142
  %v271 = vpop.f32.mrb[0].mxu0
  %v272 = vadd.f32 0.0, %v271
  %v273 = vpop.f32.mrb[0].mxu0
  %v274 = vpop.f32.mrb[0].mxu0
  %v275 = vadd.f32 0.0, %v274
  %v276 = vpop.f32.mrb[0].mxu0
  %277 = vmatprep.mubr.bf16.mxu0 0
  %278 = vmatmul.mubr.bf16.gmra.mrb[0].mxu0 %v143
  %v279 = vpop.f32.mrb[0].mxu0
  %v280 = vadd.f32 0.0, %v279
  %v281 = vpop.f32.mrb[0].mxu0
  %v282 = vpop.f32.mrb[0].mxu0
  %v283 = vadd.f32 0.0, %v282
  %v284 = vpop.f32.mrb[0].mxu0
  %285 = vmatprep.mubr.bf16.mxu0 0
  %286 = vmatmul.mubr.bf16.gmra.mrb[0].mxu0 %v144
  %v287 = vpop.f32.mrb[0].mxu0
  %v288 = vadd.f32 0.0, %v287
  %v289 = vpop.f32.mrb[0].mxu0
  %v290 = vpop.f32.mrb[0].mxu0
  %v291 = vadd.f32 0.0, %v290
  %v292 = vpop.f32.mrb[0].mxu0
  %293 = vmatprep.mubr.bf16.mxu0 0
  %294 = vmatmul.mubr.bf16.gmra.mrb[0].mxu0 %v145
  %v295 = vpop.f32.mrb[0].mxu0
  %v296 = vadd.f32 0.0, %v295
  %v297 = vpop.f32.mrb[0].mxu0
  %v298 = vpop.f32.mrb[0].mxu0
  %v299 = vadd.f32 0.0, %v298
  %v300 = vpop.f32.mrb[0].mxu0
  %301 = vmatprep.mubr.bf16.mxu0 0
  %302 = vmatmul.mubr.bf16.gmra.mrb[0].mxu0 %v146
  %v303 = vpop.f32.mrb[0].mxu0
  %v304 = vadd.f32 0.0, %v303
  %v305 = vpop.f32.mrb[0].mxu0
  %v306 = vpop.f32.mrb[0].mxu0
  %v307 = vadd.f32 0.0, %v306
  %v308 = vpop.f32.mrb[0].mxu0
  %309 = vmatprep.mubr.bf16.mxu0 0
  %310 = vmatmul.mubr.bf16.gmra.mrb[0].mxu0 %v147
  %v311 = vpop.f32.mrb[0].mxu0
  %v312 = vadd.f32 0.0, %v311
  %v313 = vpop.f32.mrb[0].mxu0
  %v314 = vpop.f32.mrb[0].mxu0
  %v315 = vadd.f32 0.0, %v314
  %v316 = vpop.f32.mrb[0].mxu0
  %317 = vmatprep.mubr.bf16.mxu0 0
  %318 = vmatmul.mubr.bf16.gmra.mrb[0].mxu0 %v148
  %v319 = vpop.f32.mrb[0].mxu0
  %v320 = vadd.f32 0.0, %v319
  %v321 = vpop.f32.mrb[0].mxu0
  %v322 = vpop.f32.mrb[0].mxu0
  %v323 = vadd.f32 0.0, %v322
  %v324 = vpop.f32.mrb[0].mxu0
  %325 = vdwg.mxu0
  %v326 = vadd.f32 %v149, %v264
  %v327 = vadd.f32 %v150, %v267
  %v328 = vadd.f32 %v151, %v272
  %v329 = vadd.f32 %v152, %v275
  %v330 = vadd.f32 %v153, %v280
  %v331 = vadd.f32 %v154, %v283
  %v332 = vadd.f32 %v155, %v288
  %v333 = vadd.f32 %v156, %v291
  %v334 = vadd.f32 %v157, %v296
  %v335 = vadd.f32 %v158, %v299
  %v336 = vadd.f32 %v159, %v304
  %v337 = vadd.f32 %v160, %v307
  %v338 = vadd.f32 %v161, %v312
  %v339 = vadd.f32 %v162, %v315
  %v340 = vadd.f32 %v163, %v320
  %v341 = vadd.f32 %v164, %v323
  %342 = vst [vmem:[#allocation2] sm:$0xff] %v326
  %343 = vst [vmem:[#allocation2 + $0x8] sm:$0xff] %v327
  %344 = vst [vmem:[#allocation2 + $0x10] sm:$0xff] %v328
  %345 = vst [vmem:[#allocation2 + $0x18] sm:$0xff] %v329
  %346 = vst [vmem:[#allocation2 + $0x20] sm:$0xff] %v330
  %347 = vst [vmem:[#allocation2 + $0x28] sm:$0xff] %v331
  %348 = vst [vmem:[#allocation2 + $0x30] sm:$0xff] %v332
  %349 = vst [vmem:[#allocation2 + $0x38] sm:$0xff] %v333
  %350 = vst [vmem:[#allocation2 + $0x40] sm:$0xff] %v334
  %351 = vst [vmem:[#allocation2 + $0x48] sm:$0xff] %v335
  %352 = vst [vmem:[#allocation2 + $0x50] sm:$0xff] %v336
  %353 = vst [vmem:[#allocation2 + $0x58] sm:$0xff] %v337
  %354 = vst [vmem:[#allocation2 + $0x60] sm:$0xff] %v338
  %355 = vst [vmem:[#allocation2 + $0x68] sm:$0xff] %v339
  %356 = vst [vmem:[#allocation2 + $0x70] sm:$0xff] %v340
  %357 = vst [vmem:[#allocation2 + $0x78] sm:$0xff] %v341
  // Predicated region
  $region42: #{wacconv_forward.4} parent=0 // pred_check
    %p358 = pneg %p33
  $region43: #{wacconv_forward.4} parent=0 // pred_check_branch
    %360 = sbr.rel (%p358) target = $region45
  $region44: #{wacconv_forward.4} parent=0 // pred_region
    %v361 = vld [vmem:[#allocation2] sm:$0xff]
    %v362 = vld [vmem:[#allocation2 + $0x8] sm:$0xff]
    %v363 = vld [vmem:[#allocation2 + $0x10] sm:$0xff]
    %v364 = vld [vmem:[#allocation2 + $0x18] sm:$0xff]
    %v365 = vld [vmem:[#allocation2 + $0x20] sm:$0xff]
    %v366 = vld [vmem:[#allocation2 + $0x28] sm:$0xff]
    %v367 = vld [vmem:[#allocation2 + $0x30] sm:$0xff]
    %v368 = vld [vmem:[#allocation2 + $0x38] sm:$0xff]
    %v369 = vld [vmem:[#allocation2 + $0x40] sm:$0xff]
    %v370 = vld [vmem:[#allocation2 + $0x48] sm:$0xff]
    %v371 = vld [vmem:[#allocation2 + $0x50] sm:$0xff]
    %v372 = vld [vmem:[#allocation2 + $0x58] sm:$0xff]
    %v373 = vld [vmem:[#allocation2 + $0x60] sm:$0xff]
    %v374 = vld [vmem:[#allocation2 + $0x68] sm:$0xff]
    %v375 = vld [vmem:[#allocation2 + $0x70] sm:$0xff]
    %v376 = vld [vmem:[#allocation2 + $0x78] sm:$0xff]
    %v377 = vmul.f32 %v361, 0.5
    %v378 = vmul.f32 %v362, 0.5
    %v379 = vmul.f32 %v363, 0.5
    %v380 = vmul.f32 %v364, 0.5
    %v381 = vmul.f32 %v365, 0.5
    %v382 = vmul.f32 %v366, 0.5
    %v383 = vmul.f32 %v367, 0.5
    %v384 = vmul.f32 %v368, 0.5
    %v385 = vmul.f32 %v369, 0.5
    %v386 = vmul.f32 %v370, 0.5
    %v387 = vmul.f32 %v371, 0.5
    %v388 = vmul.f32 %v372, 0.5
    %v389 = vmul.f32 %v373, 0.5
    %v390 = vmul.f32 %v374, 0.5
    %v391 = vmul.f32 %v375, 0.5
    %v392 = vmul.f32 %v376, 0.5
    %v393 = vmul.f32 %v361, 0.044715
    %v394 = vmul.f32 %v362, 0.044715
    %v395 = vmul.f32 %v363, 0.044715
    %v396 = vmul.f32 %v364, 0.044715
    %v397 = vmul.f32 %v365, 0.044715
    %v398 = vmul.f32 %v366, 0.044715
    %v399 = vmul.f32 %v367, 0.044715
    %v400 = vmul.f32 %v368, 0.044715
    %v401 = vmul.f32 %v369, 0.044715
    %v402 = vmul.f32 %v370, 0.044715
    %v403 = vmul.f32 %v371, 0.044715
    %v404 = vmul.f32 %v372, 0.044715
    %v405 = vmul.f32 %v373, 0.044715
    %v406 = vmul.f32 %v374, 0.044715
    %v407 = vmul.f32 %v375, 0.044715
    %v408 = vmul.f32 %v376, 0.044715
    %v409 = vmul.f32 %v393, %v361
    %v410 = vmul.f32 %v394, %v362
    %v411 = vmul.f32 %v395, %v363
    %v412 = vmul.f32 %v396, %v364
    %v413 = vmul.f32 %v397, %v365
    %v414 = vmul.f32 %v398, %v366
    %v415 = vmul.f32 %v399, %v367
    %v416 = vmul.f32 %v400, %v368
    %v417 = vmul.f32 %v401, %v369
    %v418 = vmul.f32 %v402, %v370
    %v419 = vmul.f32 %v403, %v371
    %v420 = vmul.f32 %v404, %v372
    %v421 = vmul.f32 %v405, %v373
    %v422 = vmul.f32 %v406, %v374
    %v423 = vmul.f32 %v407, %v375
    %v424 = vmul.f32 %v408, %v376
    %v425 = vmul.f32 %v409, %v361
    %v426 = vmul.f32 %v410, %v362
    %v427 = vmul.f32 %v411, %v363
    %v428 = vmul.f32 %v412, %v364
    %v429 = vmul.f32 %v413, %v365
    %v430 = vmul.f32 %v414, %v366
    %v431 = vmul.f32 %v415, %v367
    %v432 = vmul.f32 %v416, %v368
    %v433 = vmul.f32 %v417, %v369
    %v434 = vmul.f32 %v418, %v370
    %v435 = vmul.f32 %v419, %v371
    %v436 = vmul.f32 %v420, %v372
    %v437 = vmul.f32 %v421, %v373
    %v438 = vmul.f32 %v422, %v374
    %v439 = vmul.f32 %v423, %v375
    %v440 = vmul.f32 %v424, %v376
    %v441 = vadd.f32 %v361, %v425
    %v442 = vadd.f32 %v362, %v426
    %v443 = vadd.f32 %v363, %v427
    %v444 = vadd.f32 %v364, %v428
    %v445 = vadd.f32 %v365, %v429
    %v446 = vadd.f32 %v366, %v430
    %v447 = vadd.f32 %v367, %v431
    %v448 = vadd.f32 %v368, %v432
    %v449 = vadd.f32 %v369, %v433
    %v450 = vadd.f32 %v370, %v434
    %v451 = vadd.f32 %v371, %v435
    %v452 = vadd.f32 %v372, %v436
    %v453 = vadd.f32 %v373, %v437
    %v454 = vadd.f32 %v374, %v438
    %v455 = vadd.f32 %v375, %v439
    %v456 = vadd.f32 %v376, %v440
    %v457 = vmul.f32 %v441, 0.7978846
    %v458 = vmul.f32 %v442, 0.7978846
    %v459 = vmul.f32 %v443, 0.7978846
    %v460 = vmul.f32 %v444, 0.7978846
    %v461 = vmul.f32 %v445, 0.7978846
    %v462 = vmul.f32 %v446, 0.7978846
    %v463 = vmul.f32 %v447, 0.7978846
    %v464 = vmul.f32 %v448, 0.7978846
    %v465 = vmul.f32 %v449, 0.7978846
    %v466 = vmul.f32 %v450, 0.7978846
    %v467 = vmul.f32 %v451, 0.7978846
    %v468 = vmul.f32 %v452, 0.7978846
    %v469 = vmul.f32 %v453, 0.7978846
    %v470 = vmul.f32 %v454, 0.7978846
    %v471 = vmul.f32 %v455, 0.7978846
    %v472 = vmul.f32 %v456, 0.7978846
    %v473 = vtanh.pop %v457
    %v474 = vtanh.pop %v458
    %v475 = vtanh.pop %v459
    %v476 = vtanh.pop %v460
    %v477 = vtanh.pop %v461
    %v478 = vtanh.pop %v462
    %v479 = vtanh.pop %v463
    %v480 = vtanh.pop %v464
    %v481 = vtanh.pop %v465
    %v482 = vtanh.pop %v466
    %v483 = vtanh.pop %v467
    %v484 = vtanh.pop %v468
    %v485 = vtanh.pop %v469
    %v486 = vtanh.pop %v470
    %v487 = vtanh.pop %v471
    %v488 = vtanh.pop %v472
    %v489 = vadd.f32 %v473, 1.0
    %v490 = vadd.f32 %v474, 1.0
    %v491 = vadd.f32 %v475, 1.0
    %v492 = vadd.f32 %v476, 1.0
    %v493 = vadd.f32 %v477, 1.0
    %v494 = vadd.f32 %v478, 1.0
    %v495 = vadd.f32 %v479, 1.0
    %v496 = vadd.f32 %v480, 1.0
    %v497 = vadd.f32 %v481, 1.0
    %v498 = vadd.f32 %v482, 1.0
    %v499 = vadd.f32 %v483, 1.0
    %v500 = vadd.f32 %v484, 1.0
    %v501 = vadd.f32 %v485, 1.0
    %v502 = vadd.f32 %v486, 1.0
    %v503 = vadd.f32 %v487, 1.0
    %v504 = vadd.f32 %v488, 1.0
    %v505 = vmul.f32 %v377, %v489
    %v506 = vmul.f32 %v378, %v490
    %v507 = vmul.f32 %v379, %v491
    %v508 = vmul.f32 %v380, %v492
    %v509 = vmul.f32 %v381, %v493
    %v510 = vmul.f32 %v382, %v494
    %v511 = vmul.f32 %v383, %v495
    %v512 = vmul.f32 %v384, %v496
    %v513 = vmul.f32 %v385, %v497
    %v514 = vmul.f32 %v386, %v498
    %v515 = vmul.f32 %v387, %v499
    %v516 = vmul.f32 %v388, %v500
    %v517 = vmul.f32 %v389, %v501
    %v518 = vmul.f32 %v390, %v502
    %v519 = vmul.f32 %v391, %v503
    %v520 = vmul.f32 %v392, %v504
    %v521 = vld [vmem:[%s6] sm:$0x1]
    %v523 = vlaneseq
    %v524 = vshrl.u32 %v523, 7
    %v525 = vsub.s32 0, %v524
    %v526 = vrot.slane %v521, %v525
    %v528 = vmul.f32 %v505, %v526
    %v529 = vmul.f32 %v506, %v526
    %v530 = vmul.f32 %v507, %v526
    %v531 = vmul.f32 %v508, %v526
    %v532 = vmul.f32 %v509, %v526
    %v533 = vmul.f32 %v510, %v526
    %v534 = vmul.f32 %v511, %v526
    %v535 = vmul.f32 %v512, %v526
    %v536 = vmul.f32 %v513, %v526
    %v537 = vmul.f32 %v514, %v526
    %v538 = vmul.f32 %v515, %v526
    %v539 = vmul.f32 %v516, %v526
    %v540 = vmul.f32 %v517, %v526
    %v541 = vmul.f32 %v518, %v526
    %v542 = vmul.f32 %v519, %v526
    %v543 = vmul.f32 %v520, %v526
    %544 = vadd.xlane.f32.xlu0 %v528
    %v545 = vpop.xlane.xlu0 %544
    %546 = vadd.xlane.f32.xlu0 %v529
    %v547 = vpop.xlane.xlu0 %546
    %548 = vadd.xlane.f32.xlu0 %v530
    %v549 = vpop.xlane.xlu0 %548
    %550 = vadd.xlane.f32.xlu0 %v531
    %v551 = vpop.xlane.xlu0 %550
    %552 = vadd.xlane.f32.xlu0 %v532
    %v553 = vpop.xlane.xlu0 %552
    %554 = vadd.xlane.f32.xlu0 %v533
    %v555 = vpop.xlane.xlu0 %554
    %556 = vadd.xlane.f32.xlu0 %v534
    %v557 = vpop.xlane.xlu0 %556
    %558 = vadd.xlane.f32.xlu0 %v535
    %v559 = vpop.xlane.xlu0 %558
    %560 = vadd.xlane.f32.xlu0 %v536
    %v561 = vpop.xlane.xlu0 %560
    %562 = vadd.xlane.f32.xlu0 %v537
    %v563 = vpop.xlane.xlu0 %562
    %564 = vadd.xlane.f32.xlu0 %v538
    %v565 = vpop.xlane.xlu0 %564
    %566 = vadd.xlane.f32.xlu0 %v539
    %v567 = vpop.xlane.xlu0 %566
    %568 = vadd.xlane.f32.xlu0 %v540
    %v569 = vpop.xlane.xlu0 %568
    %570 = vadd.xlane.f32.xlu0 %v541
    %v571 = vpop.xlane.xlu0 %570
    %572 = vadd.xlane.f32.xlu0 %v542
    %v573 = vpop.xlane.xlu0 %572
    %574 = vadd.xlane.f32.xlu0 %v543
    %v575 = vpop.xlane.xlu0 %574
    %v576 = vmul.f32 %v545, %v505
    %v577 = vmul.f32 %v547, %v506
    %v578 = vmul.f32 %v549, %v507
    %v579 = vmul.f32 %v551, %v508
    %v580 = vmul.f32 %v553, %v509
    %v581 = vmul.f32 %v555, %v510
    %v582 = vmul.f32 %v557, %v511
    %v583 = vmul.f32 %v559, %v512
    %v584 = vmul.f32 %v561, %v513
    %v585 = vmul.f32 %v563, %v514
    %v586 = vmul.f32 %v565, %v515
    %v587 = vmul.f32 %v567, %v516
    %v588 = vmul.f32 %v569, %v517
    %v589 = vmul.f32 %v571, %v518
    %v590 = vmul.f32 %v573, %v519
    %v591 = vmul.f32 %v575, %v520
    %v592 = vld [vmem:[%s2] sm:$0xff]
    %v593 = vld [vmem:[%s2 + $0x8] sm:$0xff]
    %v594 = vld [vmem:[%s2 + $0x10] sm:$0xff]
    %v595 = vld [vmem:[%s2 + $0x18] sm:$0xff]
    %v596 = vld [vmem:[%s2 + $0x20] sm:$0xff]
    %v597 = vld [vmem:[%s2 + $0x28] sm:$0xff]
    %v598 = vld [vmem:[%s2 + $0x30] sm:$0xff]
    %v599 = vld [vmem:[%s2 + $0x38] sm:$0xff]
    %v600 = vld [vmem:[%s2 + $0x40] sm:$0xff]
    %v601 = vld [vmem:[%s2 + $0x48] sm:$0xff]
    %v602 = vld [vmem:[%s2 + $0x50] sm:$0xff]
    %v603 = vld [vmem:[%s2 + $0x58] sm:$0xff]
    %v604 = vld [vmem:[%s2 + $0x60] sm:$0xff]
    %v605 = vld [vmem:[%s2 + $0x68] sm:$0xff]
    %v606 = vld [vmem:[%s2 + $0x70] sm:$0xff]
    %v607 = vld [vmem:[%s2 + $0x78] sm:$0xff]
    %v608 = vld [vmem:[%s3] sm:$0xff]
    %v609 = vld [vmem:[%s3 + $0x8] sm:$0xff]
    %v610 = vld [vmem:[%s3 + $0x10] sm:$0xff]
    %v611 = vld [vmem:[%s3 + $0x18] sm:$0xff]
    %v612 = vld [vmem:[%s3 + $0x20] sm:$0xff]
    %v613 = vld [vmem:[%s3 + $0x28] sm:$0xff]
    %v614 = vld [vmem:[%s3 + $0x30] sm:$0xff]
    %v615 = vld [vmem:[%s3 + $0x38] sm:$0xff]
    %v616 = vld [vmem:[%s3 + $0x40] sm:$0xff]
    %v617 = vld [vmem:[%s3 + $0x48] sm:$0xff]
    %v618 = vld [vmem:[%s3 + $0x50] sm:$0xff]
    %v619 = vld [vmem:[%s3 + $0x58] sm:$0xff]
    %v620 = vld [vmem:[%s3 + $0x60] sm:$0xff]
    %v621 = vld [vmem:[%s3 + $0x68] sm:$0xff]
    %v622 = vld [vmem:[%s3 + $0x70] sm:$0xff]
    %v623 = vld [vmem:[%s3 + $0x78] sm:$0xff]
    %v624 = vmul.f32 %v592, %v608
    %v625 = vmul.f32 %v593, %v609
    %v626 = vmul.f32 %v594, %v610
    %v627 = vmul.f32 %v595, %v611
    %v628 = vmul.f32 %v596, %v612
    %v629 = vmul.f32 %v597, %v613
    %v630 = vmul.f32 %v598, %v614
    %v631 = vmul.f32 %v599, %v615
    %v632 = vmul.f32 %v600, %v616
    %v633 = vmul.f32 %v601, %v617
    %v634 = vmul.f32 %v602, %v618
    %v635 = vmul.f32 %v603, %v619
    %v636 = vmul.f32 %v604, %v620
    %v637 = vmul.f32 %v605, %v621
    %v638 = vmul.f32 %v606, %v622
    %v639 = vmul.f32 %v607, %v623
    %v640 = vld [vmem:[%s4] sm:$0x1]
    %v642 = vlaneseq
    %v643 = vshrl.u32 %v642, 7
    %v644 = vsub.s32 0, %v643
    %v645 = vrot.slane %v640, %v644
    %v647 = vmul.f32 %v624, %v645
    %v648 = vmul.f32 %v625, %v645
    %v649 = vmul.f32 %v626, %v645
    %v650 = vmul.f32 %v627, %v645
    %v651 = vmul.f32 %v628, %v645
    %v652 = vmul.f32 %v629, %v645
    %v653 = vmul.f32 %v630, %v645
    %v654 = vmul.f32 %v631, %v645
    %v655 = vmul.f32 %v632, %v645
    %v656 = vmul.f32 %v633, %v645
    %v657 = vmul.f32 %v634, %v645
    %v658 = vmul.f32 %v635, %v645
    %v659 = vmul.f32 %v636, %v645
    %v660 = vmul.f32 %v637, %v645
    %v661 = vmul.f32 %v638, %v645
    %v662 = vmul.f32 %v639, %v645
    %v663 = vpack.c.bf16 %v648, %v647
    %v664 = vpack.c.bf16 %v650, %v649
    %v665 = vpack.c.bf16 %v652, %v651
    %v666 = vpack.c.bf16 %v654, %v653
    %v667 = vpack.c.bf16 %v656, %v655
    %v668 = vpack.c.bf16 %v658, %v657
    %v669 = vpack.c.bf16 %v660, %v659
    %v670 = vpack.c.bf16 %v662, %v661
    %v671 = vld [vmem:[%s5] sm:$0xf]
    %v672 = vld [vmem:[%s5 + $0x4] sm:$0xf]
    %v673 = vld [vmem:[%s5 + $0x8] sm:$0xf]
    %v674 = vld [vmem:[%s5 + $0xc] sm:$0xf]
    %v679 = vunpack.c.l.b16 %v671
    %v680 = vunpack.c.l.b16 %v672
    %v681 = vunpack.c.l.b16 %v673
    %v682 = vunpack.c.l.b16 %v674
    %v683 = vpack.c.b16 %v680, %v679
    %v684 = vpack.c.b16 %v682, %v681
    %vm687 = vcmask 261120
    %v689 = vsel %vm687, %v663, 0
    %v692 = vsel %vm687, %v664, 0
    %v695 = vsel %vm687, %v665, 0
    %v698 = vsel %vm687, %v666, 0
    %v701 = vsel %vm687, %v667, 0
    %v704 = vsel %vm687, %v668, 0
    %v707 = vsel %vm687, %v669, 0
    %v710 = vsel %vm687, %v670, 0
    %712 = vmatprep.subr.bf16.mxu0 0
    %713 = vmatpush1.bf16.msra.mxu0 %v683
    %714 = vmatprep.subr.bf16.mxu0 0
    %715 = vmatpush1.bf16.msra.mxu0 %v684
    %716 = vmatprep.subr.bf16.mxu0 0
    %717 = vmatpush1.bf16.msra.mxu0 0
    %718 = vmatprep.subr.bf16.mxu0 0
    %719 = vmatpush1.bf16.msra.mxu0 0
    %720 = vmatprep.subr.bf16.mxu0 0
    %721 = vmatpush1.bf16.msra.mxu0 0
    %722 = vmatprep.subr.bf16.mxu0 0
    %723 = vmatpush1.bf16.msra.mxu0 0
    %724 = vmatprep.subr.bf16.mxu0 0
    %725 = vmatpush1.bf16.msra.mxu0 0
    %726 = vmatprep.subr.bf16.mxu0 0
    %727 = vmatpush1.bf16.msra.mxu0 0
    %728 = vmatprep.subr.bf16.mxu0 0
    %729 = vmatpush1.bf16.msra.mxu0 0
    %730 = vmatprep.subr.bf16.mxu0 0
    %731 = vmatpush1.bf16.msra.mxu0 0
    %732 = vmatprep.subr.bf16.mxu0 0
    %733 = vmatpush1.bf16.msra.mxu0 0
    %734 = vmatprep.subr.bf16.mxu0 0
    %735 = vmatpush1.bf16.msra.mxu0 0
    %736 = vmatprep.subr.bf16.mxu0 0
    %737 = vmatpush1.bf16.msra.mxu0 0
    %738 = vmatprep.subr.bf16.mxu0 0
    %739 = vmatpush1.bf16.msra.mxu0 0
    %740 = vmatprep.subr.bf16.mxu0 0
    %741 = vmatpush1.bf16.msra.mxu0 0
    %742 = vmatprep.subr.bf16.mxu0 0
    %743 = vmatpush1.bf16.msra.mxu0 0
    %744 = vmatprep.mubr.bf16.mxu0 0
    %745 = vmatmul.mubr.bf16.gmra.mrb[0].mxu0 %v689
    %v746 = vpop.f32.mrb[0].mxu0
    %v747 = vadd.f32 0.0, %v746
    %v748 = vpop.f32.mrb[0].mxu0
    %v749 = vpop.f32.mrb[0].mxu0
    %v750 = vadd.f32 0.0, %v749
    %v751 = vpop.f32.mrb[0].mxu0
    %752 = vmatprep.mubr.bf16.mxu0 0
    %753 = vmatmul.mubr.bf16.gmra.mrb[0].mxu0 %v692
    %v754 = vpop.f32.mrb[0].mxu0
    %v755 = vadd.f32 0.0, %v754
    %v756 = vpop.f32.mrb[0].mxu0
    %v757 = vpop.f32.mrb[0].mxu0
    %v758 = vadd.f32 0.0, %v757
    %v759 = vpop.f32.mrb[0].mxu0
    %760 = vmatprep.mubr.bf16.mxu0 0
    %761 = vmatmul.mubr.bf16.gmra.mrb[0].mxu0 %v695
    %v762 = vpop.f32.mrb[0].mxu0
    %v763 = vadd.f32 0.0, %v762
    %v764 = vpop.f32.mrb[0].mxu0
    %v765 = vpop.f32.mrb[0].mxu0
    %v766 = vadd.f32 0.0, %v765
    %v767 = vpop.f32.mrb[0].mxu0
    %768 = vmatprep.mubr.bf16.mxu0 0
    %769 = vmatmul.mubr.bf16.gmra.mrb[0].mxu0 %v698
    %v770 = vpop.f32.mrb[0].mxu0
    %v771 = vadd.f32 0.0, %v770
    %v772 = vpop.f32.mrb[0].mxu0
    %v773 = vpop.f32.mrb[0].mxu0
    %v774 = vadd.f32 0.0, %v773
    %v775 = vpop.f32.mrb[0].mxu0
    %776 = vmatprep.mubr.bf16.mxu0 0
    %777 = vmatmul.mubr.bf16.gmra.mrb[0].mxu0 %v701
    %v778 = vpop.f32.mrb[0].mxu0
    %v779 = vadd.f32 0.0, %v778
    %v780 = vpop.f32.mrb[0].mxu0
    %v781 = vpop.f32.mrb[0].mxu0
    %v782 = vadd.f32 0.0, %v781
    %v783 = vpop.f32.mrb[0].mxu0
    %784 = vmatprep.mubr.bf16.mxu0 0
    %785 = vmatmul.mubr.bf16.gmra.mrb[0].mxu0 %v704
    %v786 = vpop.f32.mrb[0].mxu0
    %v787 = vadd.f32 0.0, %v786
    %v788 = vpop.f32.mrb[0].mxu0
    %v789 = vpop.f32.mrb[0].mxu0
    %v790 = vadd.f32 0.0, %v789
    %v791 = vpop.f32.mrb[0].mxu0
    %792 = vmatprep.mubr.bf16.mxu0 0
    %793 = vmatmul.mubr.bf16.gmra.mrb[0].mxu0 %v707
    %v794 = vpop.f32.mrb[0].mxu0
    %v795 = vadd.f32 0.0, %v794
    %v796 = vpop.f32.mrb[0].mxu0
    %v797 = vpop.f32.mrb[0].mxu0
    %v798 = vadd.f32 0.0, %v797
    %v799 = vpop.f32.mrb[0].mxu0
    %800 = vmatprep.mubr.bf16.mxu0 0
    %801 = vmatmul.mubr.bf16.gmra.mrb[0].mxu0 %v710
    %v802 = vpop.f32.mrb[0].mxu0
    %v803 = vadd.f32 0.0, %v802
    %v804 = vpop.f32.mrb[0].mxu0
    %v805 = vpop.f32.mrb[0].mxu0
    %v806 = vadd.f32 0.0, %v805
    %v807 = vpop.f32.mrb[0].mxu0
    %808 = vdwg.mxu0
    %v809 = vmul.f32 %v747, 0.5
    %v810 = vmul.f32 %v750, 0.5
    %v811 = vmul.f32 %v755, 0.5
    %v812 = vmul.f32 %v758, 0.5
    %v813 = vmul.f32 %v763, 0.5
    %v814 = vmul.f32 %v766, 0.5
    %v815 = vmul.f32 %v771, 0.5
    %v816 = vmul.f32 %v774, 0.5
    %v817 = vmul.f32 %v779, 0.5
    %v818 = vmul.f32 %v782, 0.5
    %v819 = vmul.f32 %v787, 0.5
    %v820 = vmul.f32 %v790, 0.5
    %v821 = vmul.f32 %v795, 0.5
    %v822 = vmul.f32 %v798, 0.5
    %v823 = vmul.f32 %v803, 0.5
    %v824 = vmul.f32 %v806, 0.5
    %v825 = vmul.f32 %v747, 0.044715
    %v826 = vmul.f32 %v750, 0.044715
    %v827 = vmul.f32 %v755, 0.044715
    %v828 = vmul.f32 %v758, 0.044715
    %v829 = vmul.f32 %v763, 0.044715
    %v830 = vmul.f32 %v766, 0.044715
    %v831 = vmul.f32 %v771, 0.044715
    %v832 = vmul.f32 %v774, 0.044715
    %v833 = vmul.f32 %v779, 0.044715
    %v834 = vmul.f32 %v782, 0.044715
    %v835 = vmul.f32 %v787, 0.044715
    %v836 = vmul.f32 %v790, 0.044715
    %v837 = vmul.f32 %v795, 0.044715
    %v838 = vmul.f32 %v798, 0.044715
    %v839 = vmul.f32 %v803, 0.044715
    %v840 = vmul.f32 %v806, 0.044715
    %v841 = vmul.f32 %v825, %v747
    %v842 = vmul.f32 %v826, %v750
    %v843 = vmul.f32 %v827, %v755
    %v844 = vmul.f32 %v828, %v758
    %v845 = vmul.f32 %v829, %v763
    %v846 = vmul.f32 %v830, %v766
    %v847 = vmul.f32 %v831, %v771
    %v848 = vmul.f32 %v832, %v774
    %v849 = vmul.f32 %v833, %v779
    %v850 = vmul.f32 %v834, %v782
    %v851 = vmul.f32 %v835, %v787
    %v852 = vmul.f32 %v836, %v790
    %v853 = vmul.f32 %v837, %v795
    %v854 = vmul.f32 %v838, %v798
    %v855 = vmul.f32 %v839, %v803
    %v856 = vmul.f32 %v840, %v806
    %v857 = vmul.f32 %v841, %v747
    %v858 = vmul.f32 %v842, %v750
    %v859 = vmul.f32 %v843, %v755
    %v860 = vmul.f32 %v844, %v758
    %v861 = vmul.f32 %v845, %v763
    %v862 = vmul.f32 %v846, %v766
    %v863 = vmul.f32 %v847, %v771
    %v864 = vmul.f32 %v848, %v774
    %v865 = vmul.f32 %v849, %v779
    %v866 = vmul.f32 %v850, %v782
    %v867 = vmul.f32 %v851, %v787
    %v868 = vmul.f32 %v852, %v790
    %v869 = vmul.f32 %v853, %v795
    %v870 = vmul.f32 %v854, %v798
    %v871 = vmul.f32 %v855, %v803
    %v872 = vmul.f32 %v856, %v806
    %v873 = vadd.f32 %v747, %v857
    %v874 = vadd.f32 %v750, %v858
    %v875 = vadd.f32 %v755, %v859
    %v876 = vadd.f32 %v758, %v860
    %v877 = vadd.f32 %v763, %v861
    %v878 = vadd.f32 %v766, %v862
    %v879 = vadd.f32 %v771, %v863
    %v880 = vadd.f32 %v774, %v864
    %v881 = vadd.f32 %v779, %v865
    %v882 = vadd.f32 %v782, %v866
    %v883 = vadd.f32 %v787, %v867
    %v884 = vadd.f32 %v790, %v868
    %v885 = vadd.f32 %v795, %v869
    %v886 = vadd.f32 %v798, %v870
    %v887 = vadd.f32 %v803, %v871
    %v888 = vadd.f32 %v806, %v872
    %v889 = vmul.f32 %v873, 0.7978846
    %v890 = vmul.f32 %v874, 0.7978846
    %v891 = vmul.f32 %v875, 0.7978846
    %v892 = vmul.f32 %v876, 0.7978846
    %v893 = vmul.f32 %v877, 0.7978846
    %v894 = vmul.f32 %v878, 0.7978846
    %v895 = vmul.f32 %v879, 0.7978846
    %v896 = vmul.f32 %v880, 0.7978846
    %v897 = vmul.f32 %v881, 0.7978846
    %v898 = vmul.f32 %v882, 0.7978846
    %v899 = vmul.f32 %v883, 0.7978846
    %v900 = vmul.f32 %v884, 0.7978846
    %v901 = vmul.f32 %v885, 0.7978846
    %v902 = vmul.f32 %v886, 0.7978846
    %v903 = vmul.f32 %v887, 0.7978846
    %v904 = vmul.f32 %v888, 0.7978846
    %v905 = vtanh.pop %v889
    %v906 = vtanh.pop %v890
    %v907 = vtanh.pop %v891
    %v908 = vtanh.pop %v892
    %v909 = vtanh.pop %v893
    %v910 = vtanh.pop %v894
    %v911 = vtanh.pop %v895
    %v912 = vtanh.pop %v896
    %v913 = vtanh.pop %v897
    %v914 = vtanh.pop %v898
    %v915 = vtanh.pop %v899
    %v916 = vtanh.pop %v900
    %v917 = vtanh.pop %v901
    %v918 = vtanh.pop %v902
    %v919 = vtanh.pop %v903
    %v920 = vtanh.pop %v904
    %v921 = vadd.f32 %v905, 1.0
    %v922 = vadd.f32 %v906, 1.0
    %v923 = vadd.f32 %v907, 1.0
    %v924 = vadd.f32 %v908, 1.0
    %v925 = vadd.f32 %v909, 1.0
    %v926 = vadd.f32 %v910, 1.0
    %v927 = vadd.f32 %v911, 1.0
    %v928 = vadd.f32 %v912, 1.0
    %v929 = vadd.f32 %v913, 1.0
    %v930 = vadd.f32 %v914, 1.0
    %v931 = vadd.f32 %v915, 1.0
    %v932 = vadd.f32 %v916, 1.0
    %v933 = vadd.f32 %v917, 1.0
    %v934 = vadd.f32 %v918, 1.0
    %v935 = vadd.f32 %v919, 1.0
    %v936 = vadd.f32 %v920, 1.0
    %v937 = vmul.f32 %v809, %v921
    %v938 = vmul.f32 %v810, %v922
    %v939 = vmul.f32 %v811, %v923
    %v940 = vmul.f32 %v812, %v924
    %v941 = vmul.f32 %v813, %v925
    %v942 = vmul.f32 %v814, %v926
    %v943 = vmul.f32 %v815, %v927
    %v944 = vmul.f32 %v816, %v928
    %v945 = vmul.f32 %v817, %v929
    %v946 = vmul.f32 %v818, %v930
    %v947 = vmul.f32 %v819, %v931
    %v948 = vmul.f32 %v820, %v932
    %v949 = vmul.f32 %v821, %v933
    %v950 = vmul.f32 %v822, %v934
    %v951 = vmul.f32 %v823, %v935
    %v952 = vmul.f32 %v824, %v936
    %v953 = vmul.f32 %v937, 0.75
    %v954 = vmul.f32 %v938, 0.75
    %v955 = vmul.f32 %v939, 0.75
    %v956 = vmul.f32 %v940, 0.75
    %v957 = vmul.f32 %v941, 0.75
    %v958 = vmul.f32 %v942, 0.75
    %v959 = vmul.f32 %v943, 0.75
    %v960 = vmul.f32 %v944, 0.75
    %v961 = vmul.f32 %v945, 0.75
    %v962 = vmul.f32 %v946, 0.75
    %v963 = vmul.f32 %v947, 0.75
    %v964 = vmul.f32 %v948, 0.75
    %v965 = vmul.f32 %v949, 0.75
    %v966 = vmul.f32 %v950, 0.75
    %v967 = vmul.f32 %v951, 0.75
    %v968 = vmul.f32 %v952, 0.75
    %v969 = vmul.f32 %v576, 0.25
    %v970 = vmul.f32 %v577, 0.25
    %v971 = vmul.f32 %v578, 0.25
    %v972 = vmul.f32 %v579, 0.25
    %v973 = vmul.f32 %v580, 0.25
    %v974 = vmul.f32 %v581, 0.25
    %v975 = vmul.f32 %v582, 0.25
    %v976 = vmul.f32 %v583, 0.25
    %v977 = vmul.f32 %v584, 0.25
    %v978 = vmul.f32 %v585, 0.25
    %v979 = vmul.f32 %v586, 0.25
    %v980 = vmul.f32 %v587, 0.25
    %v981 = vmul.f32 %v588, 0.25
    %v982 = vmul.f32 %v589, 0.25
    %v983 = vmul.f32 %v590, 0.25
    %v984 = vmul.f32 %v591, 0.25
    %v985 = vadd.f32 %v953, %v969
    %v986 = vadd.f32 %v954, %v970
    %v987 = vadd.f32 %v955, %v971
    %v988 = vadd.f32 %v956, %v972
    %v989 = vadd.f32 %v957, %v973
    %v990 = vadd.f32 %v958, %v974
    %v991 = vadd.f32 %v959, %v975
    %v992 = vadd.f32 %v960, %v976
    %v993 = vadd.f32 %v961, %v977
    %v994 = vadd.f32 %v962, %v978
    %v995 = vadd.f32 %v963, %v979
    %v996 = vadd.f32 %v964, %v980
    %v997 = vadd.f32 %v965, %v981
    %v998 = vadd.f32 %v966, %v982
    %v999 = vadd.f32 %v967, %v983
    %v1000 = vadd.f32 %v968, %v984
    %v1001 = vmul.f32 %v985, 0.999995
    %v1002 = vmul.f32 %v986, 0.999995
    %v1003 = vmul.f32 %v987, 0.999995
    %v1004 = vmul.f32 %v988, 0.999995
    %v1005 = vmul.f32 %v989, 0.999995
    %v1006 = vmul.f32 %v990, 0.999995
    %v1007 = vmul.f32 %v991, 0.999995
    %v1008 = vmul.f32 %v992, 0.999995
    %v1009 = vmul.f32 %v993, 0.999995
    %v1010 = vmul.f32 %v994, 0.999995
    %v1011 = vmul.f32 %v995, 0.999995
    %v1012 = vmul.f32 %v996, 0.999995
    %v1013 = vmul.f32 %v997, 0.999995
    %v1014 = vmul.f32 %v998, 0.999995
    %v1015 = vmul.f32 %v999, 0.999995
    %v1016 = vmul.f32 %v1000, 0.999995
    %v1017 = vld [vmem:[%s7] sm:$0x1]
    %v1019 = vlaneseq
    %v1020 = vshrl.u32 %v1019, 7
    %v1021 = vsub.s32 0, %v1020
    %v1022 = vrot.slane %v1017, %v1021
    %v1024 = vmul.f32 %v1001, %v1022
    %v1025 = vmul.f32 %v1002, %v1022
    %v1026 = vmul.f32 %v1003, %v1022
    %v1027 = vmul.f32 %v1004, %v1022
    %v1028 = vmul.f32 %v1005, %v1022
    %v1029 = vmul.f32 %v1006, %v1022
    %v1030 = vmul.f32 %v1007, %v1022
    %v1031 = vmul.f32 %v1008, %v1022
    %v1032 = vmul.f32 %v1009, %v1022
    %v1033 = vmul.f32 %v1010, %v1022
    %v1034 = vmul.f32 %v1011, %v1022
    %v1035 = vmul.f32 %v1012, %v1022
    %v1036 = vmul.f32 %v1013, %v1022
    %v1037 = vmul.f32 %v1014, %v1022
    %v1038 = vmul.f32 %v1015, %v1022
    %v1039 = vmul.f32 %v1016, %v1022
    %v1040 = vld [vmem:[%s8] sm:$0x1]
    %v1042 = vlaneseq
    %v1043 = vshrl.u32 %v1042, 7
    %v1044 = vsub.s32 0, %v1043
    %v1045 = vrot.slane %v1040, %v1044
    %v1047 = vadd.f32 %v1024, %v1045
    %v1048 = vadd.f32 %v1025, %v1045
    %v1049 = vadd.f32 %v1026, %v1045
    %v1050 = vadd.f32 %v1027, %v1045
    %v1051 = vadd.f32 %v1028, %v1045
    %v1052 = vadd.f32 %v1029, %v1045
    %v1053 = vadd.f32 %v1030, %v1045
    %v1054 = vadd.f32 %v1031, %v1045
    %v1055 = vadd.f32 %v1032, %v1045
    %v1056 = vadd.f32 %v1033, %v1045
    %v1057 = vadd.f32 %v1034, %v1045
    %v1058 = vadd.f32 %v1035, %v1045
    %v1059 = vadd.f32 %v1036, %v1045
    %v1060 = vadd.f32 %v1037, %v1045
    %v1061 = vadd.f32 %v1038, %v1045
    %v1062 = vadd.f32 %v1039, %v1045
    %1063 = vst [vmem:[%s9] sm:$0xff] %v1047
    %1064 = vst [vmem:[%s9 + $0x8] sm:$0xff] %v1048
    %1065 = vst [vmem:[%s9 + $0x10] sm:$0xff] %v1049
    %1066 = vst [vmem:[%s9 + $0x18] sm:$0xff] %v1050
    %1067 = vst [vmem:[%s9 + $0x20] sm:$0xff] %v1051
    %1068 = vst [vmem:[%s9 + $0x28] sm:$0xff] %v1052
    %1069 = vst [vmem:[%s9 + $0x30] sm:$0xff] %v1053
    %1070 = vst [vmem:[%s9 + $0x38] sm:$0xff] %v1054
    %1071 = vst [vmem:[%s9 + $0x40] sm:$0xff] %v1055
    %1072 = vst [vmem:[%s9 + $0x48] sm:$0xff] %v1056
    %1073 = vst [vmem:[%s9 + $0x50] sm:$0xff] %v1057
    %1074 = vst [vmem:[%s9 + $0x58] sm:$0xff] %v1058
    %1075 = vst [vmem:[%s9 + $0x60] sm:$0xff] %v1059
    %1076 = vst [vmem:[%s9 + $0x68] sm:$0xff] %v1060
    %1077 = vst [vmem:[%s9 + $0x70] sm:$0xff] %v1061
    %1078 = vst [vmem:[%s9 + $0x78] sm:$0xff] %v1062
  $region45: #{wacconv_forward.4} parent=0 // pred_fallthru
    _
  // Predicated region
  $region46: #{wacconv_forward.4} parent=0 // pred_check
    _
  $region47: #{wacconv_forward.4} parent=0 // pred_check_branch
    %1080 = sbr.rel (0) target = $region49
  $region48: #{wacconv_forward.4} parent=0 // pred_region
    _
  $region49: #{wacconv_forward.4} parent=0 // pred_fallthru
    _
  // Predicated region
  $region50: #{wacconv_forward.4} parent=0 // pred_check
    _
  $region51: #{wacconv_forward.4} parent=0 // pred_check_branch
    %1082 = sbr.rel (0) target = $region53
  $region52: #{wacconv_forward.4} parent=0 // pred_region
    _
  $region53: #{wacconv_forward.4} parent=0 // pred_fallthru
    _

</llo_original>
